<compile_context>
chip_gen: v7x
topology: tpu7x:2x2x1
jax: 0.10.0
libtpu: 0.0.40
codegen_flags: <defaults>
</compile_context>

<pallas_src>
import math
from functools import lru_cache

import jax
import jax.numpy as jnp
from jax.experimental import pallas as pl
from jax.experimental.pallas import tpu as pltpu

EPS = 1e-5
ACT_DTYPE = jnp.bfloat16       # activations / GEMM operands in HBM; accumulation in f32
MAX_BM = 1024                  # row-tile cap (amortizes per-grid-step overhead)
ROW_BUDGET = 6 << 20           # rough per-buffer byte budget used to cap the row tile
VMEM_LIMIT = 32 * 1024 * 1024  # explicit scoped-VMEM limit (<= every generation's default+physical)


def _round_up(x, m):
    return ((x + m - 1) // m) * m


def _round_down(x, m):
    return (x // m) * m


def _choose_bm(M, bytes_per_row):
    """Row tile: multiple of 16 (bf16 sublane-friendly), exact divisor of M when possible,
    capped by MAX_BM / a VMEM budget, and >=2 grid steps for larger maps (keeps both v7x
    TensorCores busy)."""
    cap = min(MAX_BM, max(256, _round_down(ROW_BUDGET // max(bytes_per_row, 1), 16)))
    if M > 256:
        cap = min(cap, _round_up(-(-M // 2), 16))
    if M <= cap:
        return _round_up(M, 16)
    d = _round_down(cap, 16)
    while d >= 128:
        if M % d == 0:
            return d
        d -= 16
    nsteps = -(-M // cap)
    return _round_up(-(-M // nsteps), 16)


# ------------------------------------------------------------------
# Pallas kernels
# ------------------------------------------------------------------

@lru_cache(maxsize=None)
def _build_conv_gemm(Mp, K, N, bm, pre_relu, post_relu, has_res, out_dtype):
    """out = maybe_relu( relu?(p) @ w * scale + shift ) [+ residual]; single dot, K=T*Cin."""

    def kernel(*refs):
        if has_res:
            p_ref, w_ref, s_ref, b_ref, r_ref, o_ref = refs
        else:
            p_ref, w_ref, s_ref, b_ref, o_ref = refs
            r_ref = None
        xv = p_ref[...]                                   # bf16 (bm, K)
        if pre_relu:
            xv = jnp.maximum(xv, 0)                       # relu on bf16 (once per element)
        acc = jnp.dot(xv, w_ref[...], preferred_element_type=jnp.float32)
        y = acc * s_ref[...] + b_ref[...]
        if post_relu:
            y = jnp.maximum(y, 0.0)
        if has_res:
            y = y + r_ref[...].astype(jnp.float32)
        o_ref[...] = y.astype(out_dtype)

    in_specs = [
        pl.BlockSpec((bm, K), lambda i: (i, 0)),
        pl.BlockSpec((K, N), lambda i: (0, 0)),
        pl.BlockSpec((1, N), lambda i: (0, 0)),
        pl.BlockSpec((1, N), lambda i: (0, 0)),
    ]
    if has_res:
        in_specs.append(pl.BlockSpec((bm, N), lambda i: (i, 0)))

    bytes_io = (Mp * K + Mp * N * (2 if has_res else 1) + K * N) * 2 + 2 * N * 4
    call = pl.pallas_call(
        kernel,
        out_shape=jax.ShapeDtypeStruct((Mp, N), out_dtype),
        grid=(Mp // bm,),
        in_specs=in_specs,
        out_specs=pl.BlockSpec((bm, N), lambda i: (i, 0)),
        compiler_params=pltpu.CompilerParams(
            dimension_semantics=("parallel",),
            vmem_limit_bytes=VMEM_LIMIT),
        cost_estimate=pl.CostEstimate(flops=2 * Mp * K * N,
                                      transcendentals=0,
                                      bytes_accessed=bytes_io),
    )
    return jax.jit(call)


def conv_gemm(patches, w, scale, shift, *, pre_relu=False, post_relu=False,
              residual=None, out_dtype=ACT_DTYPE):
    """patches: (M, K) with K = k*k*Cin (tap-major), w: (K, N)."""
    M, K = patches.shape
    N = w.shape[-1]
    bm = _choose_bm(M, 2 * (K + N * (2 if residual is not None else 1)))
    Mp = _round_up(M, bm)
    patches = patches.astype(ACT_DTYPE)
    if Mp != M:
        patches = jnp.pad(patches, ((0, Mp - M), (0, 0)))
    args = [patches, w.astype(ACT_DTYPE),
            scale.reshape(1, N).astype(jnp.float32),
            shift.reshape(1, N).astype(jnp.float32)]
    if residual is not None:
        r = residual.astype(ACT_DTYPE)
        if Mp != M:
            r = jnp.pad(r, ((0, Mp - M), (0, 0)))
        args.append(r)
    fn = _build_conv_gemm(Mp, K, N, bm, bool(pre_relu), bool(post_relu),
                          residual is not None, out_dtype)
    out = fn(*args)
    return out[:M] if Mp != M else out


@lru_cache(maxsize=None)
def _build_dwpw(T, Mp, C, N, bm, post_relu, has_res, out_dtype):
    """Fused SepConv half: depthwise kxk (input already ReLU'd) -> pointwise 1x1 -> BN
    [-> ReLU] [+ residual]."""

    def kernel(*refs):
        if has_res:
            p_ref, dw_ref, pw_ref, s_ref, b_ref, r_ref, o_ref = refs
        else:
            p_ref, dw_ref, pw_ref, s_ref, b_ref, o_ref = refs
            r_ref = None
        wv = dw_ref[...]                                  # (T, C) f32
        acc = jnp.zeros((bm, C), jnp.float32)
        for t in range(T):                                # depthwise MAC on the VPU (f32)
            acc = acc + p_ref[t].astype(jnp.float32) * wv[t:t + 1, :]
        # pointwise 1x1 on the MXU: bf16 operands, f32 accumulation
        y = jnp.dot(acc.astype(ACT_DTYPE), pw_ref[...],
                    preferred_element_type=jnp.float32)
        y = y * s_ref[...] + b_ref[...]
        if post_relu:
            y = jnp.maximum(y, 0.0)
        if has_res:
            y = y + r_ref[...].astype(jnp.float32)
        o_ref[...] = y.astype(out_dtype)

    in_specs = [
        pl.BlockSpec((T, bm, C), lambda i: (0, i, 0)),
        pl.BlockSpec((T, C), lambda i: (0, 0)),
        pl.BlockSpec((C, N), lambda i: (0, 0)),
        pl.BlockSpec((1, N), lambda i: (0, 0)),
        pl.BlockSpec((1, N), lambda i: (0, 0)),
    ]
    if has_res:
        in_specs.append(pl.BlockSpec((bm, N), lambda i: (i, 0)))

    bytes_io = (Mp * C * T + Mp * N * (2 if has_res else 1) + C * N) * 2 + T * C * 4
    call = pl.pallas_call(
        kernel,
        out_shape=jax.ShapeDtypeStruct((Mp, N), out_dtype),
        grid=(Mp // bm,),
        in_specs=in_specs,
        out_specs=pl.BlockSpec((bm, N), lambda i: (i, 0)),
        compiler_params=pltpu.CompilerParams(
            dimension_semantics=("parallel",),
            vmem_limit_bytes=VMEM_LIMIT),
        cost_estimate=pl.CostEstimate(flops=2 * Mp * C * (T + N),
                                      transcendentals=0,
                                      bytes_accessed=bytes_io),
    )
    return jax.jit(call)


def conv_dwpw(patches, dw_w, pw_w, scale, shift, *, post_relu=False, residual=None,
              out_dtype=ACT_DTYPE):
    T, M, C = patches.shape
    N = pw_w.shape[-1]
    bm = _choose_bm(M, 2 * (T * C + N * (2 if residual is not None else 1)))
    Mp = _round_up(M, bm)
    patches = patches.astype(ACT_DTYPE)
    if Mp != M:
        patches = jnp.pad(patches, ((0, 0), (0, Mp - M), (0, 0)))
    args = [patches, dw_w.astype(jnp.float32), pw_w.astype(ACT_DTYPE),
            scale.reshape(1, N).astype(jnp.float32),
            shift.reshape(1, N).astype(jnp.float32)]
    if residual is not None:
        r = residual.astype(ACT_DTYPE)
        if Mp != M:
            r = jnp.pad(r, ((0, Mp - M), (0, 0)))
        args.append(r)
    fn = _build_dwpw(T, Mp, C, N, bm, bool(post_relu), residual is not None, out_dtype)
    out = fn(*args)
    return out[:M] if Mp != M else out


@lru_cache(maxsize=None)
def _build_add(Mp, C, bm, out_dtype):
    def kernel(a_ref, b_ref, o_ref):
        o_ref[...] = (a_ref[...].astype(jnp.float32)
                      + b_ref[...].astype(jnp.float32)).astype(out_dtype)

    call = pl.pallas_call(
        kernel,
        out_shape=jax.ShapeDtypeStruct((Mp, C), out_dtype),
        grid=(Mp // bm,),
        in_specs=[pl.BlockSpec((bm, C), lambda i: (i, 0)),
                  pl.BlockSpec((bm, C), lambda i: (i, 0))],
        out_specs=pl.BlockSpec((bm, C), lambda i: (i, 0)),
        compiler_params=pltpu.CompilerParams(
            dimension_semantics=("parallel",),
            vmem_limit_bytes=VMEM_LIMIT),
    )
    return jax.jit(call)


def pallas_add(a, b):
    """Fallback tiled elementwise add (used only when neither cell op ends in a GEMM)."""
    shape = a.shape
    C = shape[-1]
    M = a.size // C
    a2 = a.reshape(M, C).astype(ACT_DTYPE)
    b2 = b.reshape(M, C).astype(ACT_DTYPE)
    bm = _choose_bm(M, 6 * C)
    Mp = _round_up(M, bm)
    if Mp != M:
        a2 = jnp.pad(a2, ((0, Mp - M), (0, 0)))
        b2 = jnp.pad(b2, ((0, Mp - M), (0, 0)))
    out = _build_add(Mp, C, bm, ACT_DTYPE)(a2, b2)
    if Mp != M:
        out = out[:M]
    return out.reshape(shape)


# ------------------------------------------------------------------
# JAX glue: patch extraction and layer wrappers
# ------------------------------------------------------------------

def _taps(x, k, stride, pad):
    N, H, W, C = x.shape
    Ho = (H + 2 * pad - k) // stride + 1
    Wo = (W + 2 * pad - k) // stride + 1
    xp = jnp.pad(x, ((0, 0), (pad, pad), (pad, pad), (0, 0)))
    taps = []
    for i in range(k):
        for j in range(k):
            taps.append(xp[:, i:i + (Ho - 1) * stride + 1:stride,
                           j:j + (Wo - 1) * stride + 1:stride, :])
    return taps, Ho, Wo


def extract_patches_flat(x, k, stride, pad):
    """(N,H,W,C) -> (N*Ho*Wo, k*k*C) tap-major lane-concat (K folded into the contraction)."""
    N, H, W, C = x.shape
    taps, Ho, Wo = _taps(x, k, stride, pad)
    patches = jnp.concatenate(taps, axis=-1).reshape(N * Ho * Wo, k * k * C)
    return patches, Ho, Wo


def extract_patches_taps(x, k, stride, pad):
    """(N,H,W,C) -> (k*k, N*Ho*Wo, C) for the depthwise kernel."""
    N, H, W, C = x.shape
    taps, Ho, Wo = _taps(x, k, stride, pad)
    patches = jnp.stack(taps, axis=0).reshape(k * k, N * Ho * Wo, C)
    return patches, Ho, Wo


def conv_bn(x, w, scale, shift, *, k, stride, pad, pre_relu=False, post_relu=False,
            residual=None):
    """Conv(kxk, bias=False) + folded BN (+optional ReLUs, +optional fused residual)."""
    N_, H, W, C = x.shape
    Nout = w.shape[-1]
    if k == 1 and stride == 1 and pad == 0:
        patches, Ho, Wo = x.reshape(N_ * H * W, C), H, W
        kernel_pre_relu = pre_relu                 # 1x1: relu once per element in-kernel
    else:
        xin = jnp.maximum(x, 0) if pre_relu else x  # hoisted; fuses into patch extraction
        patches, Ho, Wo = extract_patches_flat(xin, k, stride, pad)
        kernel_pre_relu = False
    res2d = None if residual is None else residual.reshape(N_ * Ho * Wo, -1)
    y = conv_gemm(patches, w, scale, shift, pre_relu=kernel_pre_relu,
                  post_relu=post_relu, residual=res2d)
    return y.reshape(N_, Ho, Wo, Nout)


# ------------------------------------------------------------------
# Parameter init (deterministic, eval-mode BN folded to scale/shift)
# ------------------------------------------------------------------

class KeyGen:
    def __init__(self, seed):
        self.key = jax.random.PRNGKey(seed)

    def __call__(self):
        self.key, sub = jax.random.split(self.key)
        return sub


def init_bn(kg, c):
    gamma = 1.0 + 0.1 * jax.random.normal(kg(), (c,), jnp.float32)
    beta = 0.05 * jax.random.normal(kg(), (c,), jnp.float32)
    mean = 0.02 * jax.random.normal(kg(), (c,), jnp.float32)
    var = 1.0 + 0.1 * jax.random.uniform(kg(), (c,), jnp.float32)
    scale = gamma / jnp.sqrt(var + EPS)
    shift = beta - mean * scale
    return scale, shift


def init_conv_w(kg, k, cin, cout):
    fan = k * k * cin
    return jax.random.normal(kg(), (k * k, cin, cout), jnp.float32) * math.sqrt(2.0 / fan)


def init_dw_w(kg, k, c):
    return jax.random.normal(kg(), (k * k, c), jnp.float32) * math.sqrt(2.0 / (k * k))


def init_rcbn(kg, cin, cout):           # ReLUConvBN(cin, cout, 1, 1, 0)
    s, b = init_bn(kg, cout)
    w = init_conv_w(kg, 1, cin, cout).reshape(cin, cout).astype(ACT_DTYPE)
    return {"type": "rcbn", "w": w, "scale": s, "shift": b}


def init_fr(kg, cin, cout):             # FactorizedReduce(cin, cout)
    assert cout % 2 == 0
    half = cout // 2
    w1 = jax.random.normal(kg(), (cin, half), jnp.float32) * math.sqrt(2.0 / cin)
    w2 = jax.random.normal(kg(), (cin, half), jnp.float32) * math.sqrt(2.0 / cin)
    # block-diagonal weight so both shifted-slice convs + channel concat run as ONE GEMM
    wbd = jnp.zeros((2 * cin, cout), jnp.float32)
    wbd = wbd.at[:cin, :half].set(w1)
    wbd = wbd.at[cin:, half:].set(w2)
    s, b = init_bn(kg, cout)
    return {"type": "fr", "wbd": wbd.astype(ACT_DTYPE), "scale": s, "shift": b}


def init_sep(kg, c, cout, k, stride):   # SepConv(c, cout, k, stride, k//2)
    s1, b1 = init_bn(kg, c)
    s2, b2 = init_bn(kg, cout)
    pw1 = (jax.random.normal(kg(), (c, c), jnp.float32) * math.sqrt(2.0 / c)).astype(ACT_DTYPE)
    pw2 = (jax.random.normal(kg(), (c, cout), jnp.float32) * math.sqrt(2.0 / c)).astype(ACT_DTYPE)
    return {"type": "sep", "k": k, "stride": stride,
            "dw1": init_dw_w(kg, k, c), "pw1": pw1, "s1": s1, "b1": b1,
            "dw2": init_dw_w(kg, k, c), "pw2": pw2, "s2": s2, "b2": b2}


def init_cell(kg, genotype, cpp, cp, c, reduction, reduction_prev):
    pre0 = init_fr(kg, cpp, c) if reduction_prev else init_rcbn(kg, cpp, c)
    pre1 = init_rcbn(kg, cp, c)
    op_names, indices = zip(*genotype[0])
    concat = list(genotype[1])
    ops = []
    for name, idx in zip(op_names, indices):
        stride = 2 if reduction and idx < 2 else 1
        if name == "skip_connect":
            ops.append({"type": "id"} if stride == 1 else init_fr(kg, c, c))
        elif name == "sep_conv_3x3":
            ops.append(init_sep(kg, c, c, 3, stride))
        else:
            # TODO(synk): genotype restricted to sep_conv_3x3 / skip_connect ops
            raise NotImplementedError(name)
    return {"pre0": pre0, "pre1": pre1, "ops": ops, "indices": list(indices),
            "concat": concat, "steps": len(op_names) // 2, "multiplier": len(concat)}


def init_network(seed, C, num_classes, layers, genotype):
    kg = KeyGen(seed)
    p = {}
    # stem0 conv1: input channels padded 3 -> 8 (zeros) for a lane-friendlier K
    w0 = init_conv_w(kg, 3, 3, C // 2)
    w0 = jnp.pad(w0, ((0, 0), (0, 5), (0, 0))).reshape(9 * 8, C // 2)
    p["stem0_w0"] = w0.astype(ACT_DTYPE)
    p["stem0_bn0"] = init_bn(kg, C // 2)
    p["stem0_w1"] = init_conv_w(kg, 3, C // 2, C).reshape(9 * (C // 2), C).astype(ACT_DTYPE)
    p["stem0_bn1"] = init_bn(kg, C)
    p["stem1_w"] = init_conv_w(kg, 3, C, C).reshape(9 * C, C).astype(ACT_DTYPE)
    p["stem1_bn"] = init_bn(kg, C)
    cpp, cp_, ccur = C, C, C
    cells, red_prev = [], True
    for i in range(layers):
        if i in (layers // 3, 2 * layers // 3):
            ccur *= 2
            red = True
        else:
            red = False
        cell = init_cell(kg, genotype, cpp, cp_, ccur, red, red_prev)
        red_prev = red
        cells.append(cell)
        cpp, cp_ = cp_, cell["multiplier"] * ccur
    p["cells"] = cells
    cls_w = jax.random.normal(kg(), (cp_, num_classes), jnp.float32) / math.sqrt(cp_)
    p["cls_w"] = cls_w.astype(ACT_DTYPE)
    p["cls_b"] = 0.01 * jax.random.normal(kg(), (num_classes,), jnp.float32)
    return p


# ------------------------------------------------------------------
# Forward pass
# ------------------------------------------------------------------

_FUSABLE = ("sep", "fr", "rcbn")   # ops whose final GEMM epilogue can absorb the residual


def fwd_fr(p, x, residual=None):
    N, H, W, C = x.shape
    x1 = x[:, ::2, ::2, :]
    x2 = x[:, 1::2, 1::2, :]
    Ho, Wo = x1.shape[1], x1.shape[2]
    xcat = jnp.concatenate([x1, x2], axis=-1).reshape(N * Ho * Wo, 2 * C)
    res2d = None if residual is None else residual.reshape(N * Ho * Wo, -1)
    y = conv_gemm(xcat, p["wbd"], p["scale"], p["shift"], pre_relu=True, residual=res2d)
    return y.reshape(N, Ho, Wo, -1)


def fwd_sep(p, x, residual=None):
    k, s = p["k"], p["stride"]
    pad = k // 2
    Nb, H, W, C = x.shape
    xin = jnp.maximum(x, 0)            # hoisted ReLU (fuses into the patch extraction)
    patches, Ho, Wo = extract_patches_taps(xin, k, s, pad)
    # first dw+pw+BN; the second half's leading ReLU is fused into this epilogue
    y = conv_dwpw(patches, p["dw1"], p["pw1"], p["s1"], p["b1"],
                  post_relu=True).reshape(Nb, Ho, Wo, C)
    patches2, Ho2, Wo2 = extract_patches_taps(y, k, 1, pad)
    res2d = None if residual is None else residual.reshape(Nb * Ho2 * Wo2, -1)
    z = conv_dwpw(patches2, p["dw2"], p["pw2"], p["s2"], p["b2"], residual=res2d)
    return z.reshape(Nb, Ho2, Wo2, -1)


def fwd_op(p, x, residual=None):
    t = p["type"]
    if t == "id":
        return x if residual is None else pallas_add(x, residual)
    if t == "rcbn":
        return conv_bn(x, p["w"], p["scale"], p["shift"], k=1, stride=1, pad=0,
                       pre_relu=True, residual=residual)
    if t == "fr":
        return fwd_fr(p, x, residual)
    if t == "sep":
        return fwd_sep(p, x, residual)
    raise NotImplementedError(t)


def fwd_cell(p, s0, s1):
    s0 = fwd_op(p["pre0"], s0)
    s1 = fwd_op(p["pre1"], s1)
    states = [s0, s1]
    for i in range(p["steps"]):
        i1, i2 = p["indices"][2 * i], p["indices"][2 * i + 1]
        op1, op2 = p["ops"][2 * i], p["ops"][2 * i + 1]
        # fuse the node sum (h1 + h2) into the epilogue of whichever op ends in a GEMM
        if op2["type"] in _FUSABLE:
            h1 = fwd_op(op1, states[i1])
            s = fwd_op(op2, states[i2], residual=h1)
        elif op1["type"] in _FUSABLE:
            h2 = fwd_op(op2, states[i2])
            s = fwd_op(op1, states[i1], residual=h2)
        else:
            s = pallas_add(fwd_op(op1, states[i1]), fwd_op(op2, states[i2]))
        states.append(s)
    return jnp.concatenate([states[idx] for idx in p["concat"]], axis=-1)


def network_forward(params, x_nchw):
    x = jnp.transpose(x_nchw, (0, 2, 3, 1)).astype(ACT_DTYPE)       # NCHW -> NHWC
    x = jnp.pad(x, ((0, 0), (0, 0), (0, 0), (0, 5)))                # 3 -> 8 zero channels
    # stem0: Conv3x3/s2 + BN + ReLU + Conv3x3/s2 + BN
    s0 = conv_bn(x, params["stem0_w0"], *params["stem0_bn0"],
                 k=3, stride=2, pad=1, post_relu=True)
    s0 = conv_bn(s0, params["stem0_w1"], *params["stem0_bn1"], k=3, stride=2, pad=1)
    # stem1: ReLU + Conv3x3/s2 + BN
    s1 = conv_bn(s0, params["stem1_w"], *params["stem1_bn"],
                 k=3, stride=2, pad=1, pre_relu=True)
    for cell in params["cells"]:
        s0, s1 = s1, fwd_cell(cell, s0, s1)
    # global_pooling = AvgPool2d(7): valid only when exactly one 7x7 window contributes
    Nb, H, W, C = s1.shape
    assert 7 <= H < 14 and 7 <= W < 14, "final feature map must yield a single 7x7 window"
    pooled = jnp.mean(s1[:, :7, :7, :].astype(jnp.float32), axis=(1, 2))   # (Nb, C)
    ones = jnp.ones((params["cls_b"].shape[0],), jnp.float32)
    logits = conv_gemm(pooled, params["cls_w"], ones, params["cls_b"],
                       out_dtype=jnp.float32)
    logits_aux = None  # eval mode: auxiliary head is not applied
    return logits, logits_aux


# ------------------------------------------------------------------

if __name__ == "__main__":
    C = 8
    num_classes = 10
    layers = 3
    # genotype = (list of (op_name, index), concat) as consumed by Cell._compile
    genotype = (
        [("sep_conv_3x3", 0), ("skip_connect", 1),
         ("sep_conv_3x3", 1), ("skip_connect", 0),
         ("skip_connect", 0), ("sep_conv_3x3", 1),
         ("skip_connect", 2), ("sep_conv_3x3", 3)],
        [2, 3, 4, 5],
    )
    params = init_network(0, C, num_classes, layers, genotype)

    # Spatial must be 224 so the final feature map is exactly 7x7 for AvgPool2d(7)
    # (ImageNet convention); channel count / layers kept small.
    key = jax.random.PRNGKey(0)
    x = jax.random.normal(key, (2, 3, 224, 224), jnp.float32)  # NCHW, like the PyTorch module

    fwd = jax.jit(lambda inp: network_forward(params, inp))
    logits, logits_aux = fwd(x)
    jax.block_until_ready(logits)
    assert logits.shape == (2, num_classes)
    assert logits_aux is None
    print("KERNEL_OK")
</pallas_src>

<mosaic_0001>
module attributes {stable_mosaic.version = 11 : i64} {
  func.func @kernel(%arg0: i32, %arg1: memref<896x72xbf16, #tpu.memory_space<vmem>>, %arg2: memref<72x4xbf16, #tpu.memory_space<vmem>>, %arg3: memref<1x4xf32, #tpu.memory_space<vmem>>, %arg4: memref<1x4xf32, #tpu.memory_space<vmem>>, %arg5: memref<896x4xbf16, #tpu.memory_space<vmem>>) attributes {dimension_semantics = [#tpu.dimension_semantics<parallel>], iteration_bounds = array<i64: 28>, scalar_prefetch = 0 : i64, scratch_operands = 0 : i64, tpu.core_type = #tpu.core_type<tc>, window_params = [{transform_indices = @transform_0, window_bounds = array<i64: 896, 72>}, {pipeline_mode = #tpu.pipeline_mode<synchronous>, transform_indices = @transform_1, window_bounds = array<i64: 72, 4>}, {pipeline_mode = #tpu.pipeline_mode<synchronous>, transform_indices = @transform_2, window_bounds = array<i64: 1, 4>}, {pipeline_mode = #tpu.pipeline_mode<synchronous>, transform_indices = @transform_3, window_bounds = array<i64: 1, 4>}, {transform_indices = @transform_4, window_bounds = array<i64: 896, 4>}]} {
    %c0 = arith.constant 0 : index
    %c0_0 = arith.constant 0 : index
    %0 = vector.load %arg1[%c0, %c0_0] : memref<896x72xbf16, #tpu.memory_space<vmem>>, vector<896x72xbf16>
    %c0_1 = arith.constant 0 : index
    %c0_2 = arith.constant 0 : index
    %1 = vector.load %arg2[%c0_1, %c0_2] : memref<72x4xbf16, #tpu.memory_space<vmem>>, vector<72x4xbf16>
    %cst = arith.constant dense<0.000000e+00> : vector<896x4xf32>
    %2 = tpu.matmul %0, %1, %cst {dimension_numbers = #tpu.dot_dimension_numbers<[1], [0], [0], [1], [0, 0, 1, 1], [], []>} : vector<896x72xbf16>, vector<72x4xbf16>, vector<896x4xf32> -> vector<896x4xf32>
    %c0_3 = arith.constant 0 : index
    %c0_4 = arith.constant 0 : index
    %3 = vector.load %arg3[%c0_3, %c0_4] : memref<1x4xf32, #tpu.memory_space<vmem>>, vector<1x4xf32>
    %4 = vector.broadcast %3 : vector<1x4xf32> to vector<896x4xf32>
    %5 = arith.mulf %2, %4 : vector<896x4xf32>
    %c0_5 = arith.constant 0 : index
    %c0_6 = arith.constant 0 : index
    %6 = vector.load %arg4[%c0_5, %c0_6] : memref<1x4xf32, #tpu.memory_space<vmem>>, vector<1x4xf32>
    %7 = vector.broadcast %6 : vector<1x4xf32> to vector<896x4xf32>
    %8 = arith.addf %5, %7 : vector<896x4xf32>
    %cst_7 = arith.constant 0.000000e+00 : f32
    %9 = vector.broadcast %cst_7 : f32 to vector<896x4xf32>
    %10 = arith.maximumf %8, %9 : vector<896x4xf32>
    %11 = arith.truncf %10 : vector<896x4xf32> to vector<896x4xbf16>
    %c0_8 = arith.constant 0 : index
    %c0_9 = arith.constant 0 : index
    %12 = vector.load %arg5[%c0_8, %c0_9] : memref<896x4xbf16, #tpu.memory_space<vmem>>, vector<896x4xbf16>
    tpu.vector_store %arg5[%c0_8, %c0_9], %11 {strides = array<i32>} : memref<896x4xbf16, #tpu.memory_space<vmem>>, vector<896x4xbf16>,
    return
  }
  func.func @transform_0(%arg0: i32) -> (i32, i32) {
    %c0_i32 = arith.constant 0 : i32
    %c0_i32_0 = arith.constant 0 : i32
    return %arg0, %c0_i32 : i32, i32
  }
  func.func @transform_1(%arg0: i32) -> (i32, i32) {
    %c0_i32 = arith.constant 0 : i32
    %c0_i32_0 = arith.constant 0 : i32
    %c0_i32_1 = arith.constant 0 : i32
    return %c0_i32, %c0_i32_0 : i32, i32
  }
  func.func @transform_2(%arg0: i32) -> (i32, i32) {
    %c0_i32 = arith.constant 0 : i32
    %c0_i32_0 = arith.constant 0 : i32
    %c0_i32_1 = arith.constant 0 : i32
    return %c0_i32, %c0_i32_0 : i32, i32
  }
  func.func @transform_3(%arg0: i32) -> (i32, i32) {
    %c0_i32 = arith.constant 0 : i32
    %c0_i32_0 = arith.constant 0 : i32
    %c0_i32_1 = arith.constant 0 : i32
    return %c0_i32, %c0_i32_0 : i32, i32
  }
  func.func @transform_4(%arg0: i32) -> (i32, i32) {
    %c0_i32 = arith.constant 0 : i32
    %c0_i32_0 = arith.constant 0 : i32
    return %arg0, %c0_i32 : i32, i32
  }
}

</mosaic_0001>

<llo_original>
// kernel: tpu_custom_call.1
$region0: #{tpu_custom_call.1}
  #allocation0 [shape = 'u32[]', space=smem, size = 0x4, offset = 0x4, fixed_abs, tag = 'smem constant byte address 0x4 - core index']
  #allocation1 [shape = 'u32[144,128]{1,0:T(1,128)}', space=vmem, size = 0x12000, scoped, tag = 'internal scratch']
  %s0 = inlined_call_operand.vmem [shape: bf16[25088,72], index: 0, kind: input, shape index: {}]
  %s1 = inlined_call_operand.vmem [shape: bf16[72,4], index: 1, kind: input, shape index: {}]
  %s2 = inlined_call_operand.vmem [shape: f32[1,4], index: 2, kind: input, shape index: {}]
  %s3 = inlined_call_operand.vmem [shape: f32[1,4], index: 3, kind: input, shape index: {}]
  %s4 = inlined_call_operand.vmem [shape: bf16[25088,4], index: 4, kind: output, shape index: {}]
  %s5 = sld [smem:[#allocation0]]
  $region49: #{tpu_custom_call.1} parent=0
    _
  %s7 = ssub.s32 1, %s5
  %s8 = scalar_select 0, %s7, %s5
  loop: start=0, step=1, limit=30
  $region2: #{tpu_custom_call.1} parent=0 // loop_pre_header
    _
  $region3: #{tpu_custom_call.1} parent=0 // loop_header
    %s10 = sphi 0, %s14
    %p11 = scmp.ge.s32.totalorder %s10, 30
    %s20 = sphi 0, %s22
    %s23 = sphi 0, %s20
    %s24 = sphi 0, %s23
    %s40 = sphi 0, %s24
    %s44 = sphi 0, %s44
    %s46 = sphi 0, %s44
    %s47 = sphi 0, %s46
    %s61 = sphi 0, %s47
    %s65 = sphi 0, %s65
    %s67 = sphi 0, %s65
    %s68 = sphi 0, %s67
    %s82 = sphi 0, %s68
    %s86 = sphi 0, %s86
    %s88 = sphi 0, %s86
    %s89 = sphi 0, %s88
    %s103 = sphi 0, %s89
    %s109 = sphi 0, %s111
    %s112 = sphi 0, %s109
    %s113 = sphi 0, %s112
    %s129 = sphi 0, %s113
  $region4: #{tpu_custom_call.1} parent=0 // loop_header_branch
    %13 = sbr.rel (%p11) target = $region8
  $region5: #{tpu_custom_call.1} parent=0 // loop_body
    %s15 = ssub.s32 %s10, 1
    %s16 = ssub.s32 %s10, 2
    %s17 = sadd.s32 %s10, 1
    %s18 = ssub.s32 %s10, %s17
    %p19 = scmp.eq.s32.totalorder %s18, 0
    %s21 = sadd.s32 %s20, 1
    %s22 = scalar_select %p19, %s20, %s21
    %p25 = pneg %p19
    %p26 = scmp.eq.s32.totalorder %s10, 27
    %p27 = por %p25, %p26
    %p28 = scmp.ne.s32.totalorder %s20, %s23
    %p29 = scmp.eq.s32.totalorder %s10, 0
    %p30 = por %p28, %p29
    %p31 = scmp.ne.s32.totalorder %s20, %s23
    %p32 = scmp.eq.s32.totalorder %s15, 27
    %p33 = por %p31, %p32
    %p34 = scmp.ne.s32.totalorder %s23, %s24
    %p35 = scmp.eq.s32.totalorder %s15, 0
    %p36 = por %p34, %p35
    %p37 = scmp.ne.s32.totalorder %s23, %s24
    %p38 = scmp.eq.s32.totalorder %s16, 27
    %p39 = por %p37, %p38
    %p41 = scmp.ne.s32.totalorder %s24, %s40
    %p42 = scmp.eq.s32.totalorder %s16, 0
    %p43 = por %p41, %p42
    %s45 = sadd.s32 %s44, 1
    %p48 = scmp.eq.s32.totalorder %s10, 27
    %p49 = scmp.ne.s32.totalorder %s44, %s46
    %p50 = scmp.eq.s32.totalorder %s10, 0
    %p51 = por %p49, %p50
    %p52 = scmp.ne.s32.totalorder %s44, %s46
    %p53 = scmp.eq.s32.totalorder %s15, 27
    %p54 = por %p52, %p53
    %p55 = scmp.ne.s32.totalorder %s46, %s47
    %p56 = scmp.eq.s32.totalorder %s15, 0
    %p57 = por %p55, %p56
    %p58 = scmp.ne.s32.totalorder %s46, %s47
    %p59 = scmp.eq.s32.totalorder %s16, 27
    %p60 = por %p58, %p59
    %p62 = scmp.ne.s32.totalorder %s47, %s61
    %p63 = scmp.eq.s32.totalorder %s16, 0
    %p64 = por %p62, %p63
    %s66 = sadd.s32 %s65, 1
    %p69 = scmp.eq.s32.totalorder %s10, 27
    %p70 = scmp.ne.s32.totalorder %s65, %s67
    %p71 = scmp.eq.s32.totalorder %s10, 0
    %p72 = por %p70, %p71
    %p73 = scmp.ne.s32.totalorder %s65, %s67
    %p74 = scmp.eq.s32.totalorder %s15, 27
    %p75 = por %p73, %p74
    %p76 = scmp.ne.s32.totalorder %s67, %s68
    %p77 = scmp.eq.s32.totalorder %s15, 0
    %p78 = por %p76, %p77
    %p79 = scmp.ne.s32.totalorder %s67, %s68
    %p80 = scmp.eq.s32.totalorder %s16, 27
    %p81 = por %p79, %p80
    %p83 = scmp.ne.s32.totalorder %s68, %s82
    %p84 = scmp.eq.s32.totalorder %s16, 0
    %p85 = por %p83, %p84
    %s87 = sadd.s32 %s86, 1
    %p90 = scmp.eq.s32.totalorder %s10, 27
    %p91 = scmp.ne.s32.totalorder %s86, %s88
    %p92 = scmp.eq.s32.totalorder %s10, 0
    %p93 = por %p91, %p92
    %p94 = scmp.ne.s32.totalorder %s86, %s88
    %p95 = scmp.eq.s32.totalorder %s15, 27
    %p96 = por %p94, %p95
    %p97 = scmp.ne.s32.totalorder %s88, %s89
    %p98 = scmp.eq.s32.totalorder %s15, 0
    %p99 = por %p97, %p98
    %p100 = scmp.ne.s32.totalorder %s88, %s89
    %p101 = scmp.eq.s32.totalorder %s16, 27
    %p102 = por %p100, %p101
    %p104 = scmp.ne.s32.totalorder %s89, %s103
    %p105 = scmp.eq.s32.totalorder %s16, 0
    %p106 = por %p104, %p105
    %s107 = ssub.s32 %s10, %s17
    %p108 = scmp.eq.s32.totalorder %s107, 0
    %s110 = sadd.s32 %s109, 1
    %s111 = scalar_select %p108, %s109, %s110
    %p114 = pneg %p108
    %p115 = scmp.eq.s32.totalorder %s10, 27
    %p116 = por %p114, %p115
    %p117 = scmp.ne.s32.totalorder %s109, %s112
    %p118 = scmp.eq.s32.totalorder %s10, 0
    %p119 = por %p117, %p118
    %p120 = scmp.ne.s32.totalorder %s109, %s112
    %p121 = scmp.eq.s32.totalorder %s15, 27
    %p122 = por %p120, %p121
    %p123 = scmp.ne.s32.totalorder %s112, %s113
    %p124 = scmp.eq.s32.totalorder %s15, 0
    %p125 = por %p123, %p124
    %p126 = scmp.ne.s32.totalorder %s112, %s113
    %p127 = scmp.eq.s32.totalorder %s16, 27
    %p128 = por %p126, %p127
    %p130 = scmp.ne.s32.totalorder %s113, %s129
    %p131 = scmp.eq.s32.totalorder %s16, 0
    %p132 = por %p130, %p131
    %p133 = scmp.le.s32.totalorder 1, %s10
    %p134 = scmp.lt.s32.totalorder %s10, 29
    %p135 = pnand %p133, %p134
    %p136 = pneg %p135
    // Predicated region
    $region9: #{tpu_custom_call.1} parent=5 // pred_check
      _
    $region10: #{tpu_custom_call.1} parent=5 // pred_check_branch
      %138 = sbr.rel (%p135) target = $region12
    $region11: #{tpu_custom_call.1} parent=5 // pred_region
      %s139 = ssub.s32 %s10, 1
      // Predicated region
      $region13: #{tpu_custom_call.1} parent=11 // pred_check
        %p140 = pneg %p57
      $region14: #{tpu_custom_call.1} parent=11 // pred_check_branch
        %142 = sbr.rel (%p140) target = $region16
      $region15: #{tpu_custom_call.1} parent=11 // pred_region
        _
      $region16: #{tpu_custom_call.1} parent=11 // pred_fallthru
        _
      // Predicated region
      $region17: #{tpu_custom_call.1} parent=11 // pred_check
        %p143 = pneg %p78
      $region18: #{tpu_custom_call.1} parent=11 // pred_check_branch
        %145 = sbr.rel (%p143) target = $region20
      $region19: #{tpu_custom_call.1} parent=11 // pred_region
        _
      $region20: #{tpu_custom_call.1} parent=11 // pred_fallthru
        _
      // Predicated region
      $region21: #{tpu_custom_call.1} parent=11 // pred_check
        %p146 = pneg %p99
      $region22: #{tpu_custom_call.1} parent=11 // pred_check_branch
        %148 = sbr.rel (%p146) target = $region24
      $region23: #{tpu_custom_call.1} parent=11 // pred_region
        _
      $region24: #{tpu_custom_call.1} parent=11 // pred_fallthru
        _
    $region12: #{tpu_custom_call.1} parent=5 // pred_fallthru
      _
    %p149 = scmp.lt.s32.totalorder %s10, 28
    // Predicated region
    $region25: #{tpu_custom_call.1} parent=5 // pred_check
      %p150 = pneg %p149
    $region26: #{tpu_custom_call.1} parent=5 // pred_check_branch
      %152 = sbr.rel (%p150) target = $region28
    $region27: #{tpu_custom_call.1} parent=5 // pred_region
      // Predicated region
      $region29: #{tpu_custom_call.1} parent=27 // pred_check
        %p153 = pneg %p30
      $region30: #{tpu_custom_call.1} parent=27 // pred_check_branch
        %155 = sbr.rel (%p153) target = $region32
      $region31: #{tpu_custom_call.1} parent=27 // pred_region
        %s156 = smul.u32 112, %s10
        %p157 = scmp.lt.s32.totalorder %s156, 3135
        %s158 = scalar_select %p157, %s156, 3135
        %s159 = smul.addr %s158, 4
        %s160 = scalar_lea.vmem %s0, %s159
        %s161 = smul.u32 112, %s10
      $region32: #{tpu_custom_call.1} parent=27 // pred_fallthru
        _
    $region28: #{tpu_custom_call.1} parent=5 // pred_fallthru
      _
    %p162 = scmp.le.s32.totalorder 1, %s10
    %p163 = scmp.lt.s32.totalorder %s10, 29
    %p164 = pnand %p162, %p163
    %p165 = pneg %p164
    // Predicated region
    $region33: #{tpu_custom_call.1} parent=5 // pred_check
      _
    $region34: #{tpu_custom_call.1} parent=5 // pred_check_branch
      %167 = sbr.rel (%p164) target = $region36
    $region35: #{tpu_custom_call.1} parent=5 // pred_region
      %s168 = ssub.s32 %s10, 1
      %s169 = smul.u32 112, %s15
      %p170 = scmp.lt.s32.totalorder %s169, 3135
      %s171 = scalar_select %p170, %s169, 3135
      %s172 = smul.addr %s171, 4
      %s173 = scalar_lea.vmem %s0, %s172
      %p174 = pneg %p36
      %p175 = pneg %p33
      %p176 = pneg %p57
      %p177 = pneg %p54
      %p178 = pneg %p78
      %p179 = pneg %p75
      %p180 = pneg %p99
      %p181 = pneg %p96
      %p182 = pneg %p125
      %p183 = pneg %p122
      %s184 = smul.u32 112, %s15
      %p185 = scmp.lt.s32.totalorder %s184, 3135
      %s186 = scalar_select %p185, %s184, 3135
      %s187 = smul.addr %s186, 4
      %s188 = scalar_lea.vmem %s4, %s187
      %s189 = smul.u32 112, %s15
      %p190 = scmp.lt.s32.totalorder %s189, 3135
      %s191 = scalar_select %p190, %s189, 3135
      %s192 = smul.addr %s191, 4
      %s193 = scalar_lea.vmem %s0, %s192
      %s194 = smul.u32 112, %s15
      %s195 = smul.u32 112, %s15
      %p196 = scmp.lt.s32.totalorder %s195, 3135
      %s197 = scalar_select %p196, %s195, 3135
      %s198 = smul.addr %s197, 4
      %s199 = scalar_lea.vmem %s4, %s198
      %s200 = smul.u32 112, %s15
      %v202 = vld [vmem:[%s193] sm:$0xf]
      %v203 = vld [vmem:[%s193 + $0x4] sm:$0xf]
      %v204 = vld [vmem:[%s193 + $0x8] sm:$0xf]
      %v205 = vld [vmem:[%s193 + $0xc] sm:$0xf]
      %v206 = vld [vmem:[%s193 + $0x10] sm:$0xf]
      %v207 = vld [vmem:[%s193 + $0x14] sm:$0xf]
      %v208 = vld [vmem:[%s193 + $0x18] sm:$0xf]
      %v209 = vld [vmem:[%s193 + $0x1c] sm:$0xf]
      %v210 = vld [vmem:[%s193 + $0x20] sm:$0xf]
      %v211 = vld [vmem:[%s193 + $0x24] sm:$0xf]
      %v212 = vld [vmem:[%s193 + $0x28] sm:$0xf]
      %v213 = vld [vmem:[%s193 + $0x2c] sm:$0xf]
      %v214 = vld [vmem:[%s193 + $0x30] sm:$0xf]
      %v215 = vld [vmem:[%s193 + $0x34] sm:$0xf]
      %v216 = vld [vmem:[%s193 + $0x38] sm:$0xf]
      %v217 = vld [vmem:[%s193 + $0x3c] sm:$0xf]
      %v218 = vld [vmem:[%s193 + $0x40] sm:$0xf]
      %v219 = vld [vmem:[%s193 + $0x44] sm:$0xf]
      %v220 = vld [vmem:[%s193 + $0x48] sm:$0xf]
      %v221 = vld [vmem:[%s193 + $0x4c] sm:$0xf]
      %v222 = vld [vmem:[%s193 + $0x50] sm:$0xf]
      %v223 = vld [vmem:[%s193 + $0x54] sm:$0xf]
      %v224 = vld [vmem:[%s193 + $0x58] sm:$0xf]
      %v225 = vld [vmem:[%s193 + $0x5c] sm:$0xf]
      %v226 = vld [vmem:[%s193 + $0x60] sm:$0xf]
      %v227 = vld [vmem:[%s193 + $0x64] sm:$0xf]
      %v228 = vld [vmem:[%s193 + $0x68] sm:$0xf]
      %v229 = vld [vmem:[%s193 + $0x6c] sm:$0xf]
      %v230 = vld [vmem:[%s193 + $0x70] sm:$0xf]
      %v231 = vld [vmem:[%s193 + $0x74] sm:$0xf]
      %v232 = vld [vmem:[%s193 + $0x78] sm:$0xf]
      %v233 = vld [vmem:[%s193 + $0x7c] sm:$0xf]
      %v234 = vld [vmem:[%s193 + $0x80] sm:$0xf]
      %v235 = vld [vmem:[%s193 + $0x84] sm:$0xf]
      %v236 = vld [vmem:[%s193 + $0x88] sm:$0xf]
      %v237 = vld [vmem:[%s193 + $0x8c] sm:$0xf]
      %v238 = vld [vmem:[%s193 + $0x90] sm:$0xf]
      %v239 = vld [vmem:[%s193 + $0x94] sm:$0xf]
      %v240 = vld [vmem:[%s193 + $0x98] sm:$0xf]
      %v241 = vld [vmem:[%s193 + $0x9c] sm:$0xf]
      %v242 = vld [vmem:[%s193 + $0xa0] sm:$0xf]
      %v243 = vld [vmem:[%s193 + $0xa4] sm:$0xf]
      %v244 = vld [vmem:[%s193 + $0xa8] sm:$0xf]
      %v245 = vld [vmem:[%s193 + $0xac] sm:$0xf]
      %v246 = vld [vmem:[%s193 + $0xb0] sm:$0xf]
      %v247 = vld [vmem:[%s193 + $0xb4] sm:$0xf]
      %v248 = vld [vmem:[%s193 + $0xb8] sm:$0xf]
      %v249 = vld [vmem:[%s193 + $0xbc] sm:$0xf]
      %v250 = vld [vmem:[%s193 + $0xc0] sm:$0xf]
      %v251 = vld [vmem:[%s193 + $0xc4] sm:$0xf]
      %v252 = vld [vmem:[%s193 + $0xc8] sm:$0xf]
      %v253 = vld [vmem:[%s193 + $0xcc] sm:$0xf]
      %v254 = vld [vmem:[%s193 + $0xd0] sm:$0xf]
      %v255 = vld [vmem:[%s193 + $0xd4] sm:$0xf]
      %v256 = vld [vmem:[%s193 + $0xd8] sm:$0xf]
      %v257 = vld [vmem:[%s193 + $0xdc] sm:$0xf]
      %v258 = vld [vmem:[%s193 + $0xe0] sm:$0xf]
      %v259 = vld [vmem:[%s193 + $0xe4] sm:$0xf]
      %v260 = vld [vmem:[%s193 + $0xe8] sm:$0xf]
      %v261 = vld [vmem:[%s193 + $0xec] sm:$0xf]
      %v262 = vld [vmem:[%s193 + $0xf0] sm:$0xf]
      %v263 = vld [vmem:[%s193 + $0xf4] sm:$0xf]
      %v264 = vld [vmem:[%s193 + $0xf8] sm:$0xf]
      %v265 = vld [vmem:[%s193 + $0xfc] sm:$0xf]
      %v266 = vld [vmem:[%s193 + $0x100] sm:$0xf]
      %v267 = vld [vmem:[%s193 + $0x104] sm:$0xf]
      %v268 = vld [vmem:[%s193 + $0x108] sm:$0xf]
      %v269 = vld [vmem:[%s193 + $0x10c] sm:$0xf]
      %v270 = vld [vmem:[%s193 + $0x110] sm:$0xf]
      %v271 = vld [vmem:[%s193 + $0x114] sm:$0xf]
      %v272 = vld [vmem:[%s193 + $0x118] sm:$0xf]
      %v273 = vld [vmem:[%s193 + $0x11c] sm:$0xf]
      %v274 = vld [vmem:[%s193 + $0x120] sm:$0xf]
      %v275 = vld [vmem:[%s193 + $0x124] sm:$0xf]
      %v276 = vld [vmem:[%s193 + $0x128] sm:$0xf]
      %v277 = vld [vmem:[%s193 + $0x12c] sm:$0xf]
      %v278 = vld [vmem:[%s193 + $0x130] sm:$0xf]
      %v279 = vld [vmem:[%s193 + $0x134] sm:$0xf]
      %v280 = vld [vmem:[%s193 + $0x138] sm:$0xf]
      %v281 = vld [vmem:[%s193 + $0x13c] sm:$0xf]
      %v282 = vld [vmem:[%s193 + $0x140] sm:$0xf]
      %v283 = vld [vmem:[%s193 + $0x144] sm:$0xf]
      %v284 = vld [vmem:[%s193 + $0x148] sm:$0xf]
      %v285 = vld [vmem:[%s193 + $0x14c] sm:$0xf]
      %v286 = vld [vmem:[%s193 + $0x150] sm:$0xf]
      %v287 = vld [vmem:[%s193 + $0x154] sm:$0xf]
      %v288 = vld [vmem:[%s193 + $0x158] sm:$0xf]
      %v289 = vld [vmem:[%s193 + $0x15c] sm:$0xf]
      %v290 = vld [vmem:[%s193 + $0x160] sm:$0xf]
      %v291 = vld [vmem:[%s193 + $0x164] sm:$0xf]
      %v292 = vld [vmem:[%s193 + $0x168] sm:$0xf]
      %v293 = vld [vmem:[%s193 + $0x16c] sm:$0xf]
      %v294 = vld [vmem:[%s193 + $0x170] sm:$0xf]
      %v295 = vld [vmem:[%s193 + $0x174] sm:$0xf]
      %v296 = vld [vmem:[%s193 + $0x178] sm:$0xf]
      %v297 = vld [vmem:[%s193 + $0x17c] sm:$0xf]
      %v298 = vld [vmem:[%s193 + $0x180] sm:$0xf]
      %v299 = vld [vmem:[%s193 + $0x184] sm:$0xf]
      %v300 = vld [vmem:[%s193 + $0x188] sm:$0xf]
      %v301 = vld [vmem:[%s193 + $0x18c] sm:$0xf]
      %v302 = vld [vmem:[%s193 + $0x190] sm:$0xf]
      %v303 = vld [vmem:[%s193 + $0x194] sm:$0xf]
      %v304 = vld [vmem:[%s193 + $0x198] sm:$0xf]
      %v305 = vld [vmem:[%s193 + $0x19c] sm:$0xf]
      %v306 = vld [vmem:[%s193 + $0x1a0] sm:$0xf]
      %v307 = vld [vmem:[%s193 + $0x1a4] sm:$0xf]
      %v308 = vld [vmem:[%s193 + $0x1a8] sm:$0xf]
      %v309 = vld [vmem:[%s193 + $0x1ac] sm:$0xf]
      %v310 = vld [vmem:[%s193 + $0x1b0] sm:$0xf]
      %v311 = vld [vmem:[%s193 + $0x1b4] sm:$0xf]
      %v312 = vld [vmem:[%s193 + $0x1b8] sm:$0xf]
      %v313 = vld [vmem:[%s193 + $0x1bc] sm:$0xf]
      %v314 = vld [vmem:[%s1] sm:$0xf]
      %v315 = vld [vmem:[%s1 + $0x4] sm:$0xf]
      %v316 = vld [vmem:[%s1 + $0x8] sm:$0xf]
      %v317 = vld [vmem:[%s1 + $0xc] sm:$0xf]
      %v318 = vld [vmem:[%s1 + $0x10] sm:$0xf]
      %v319 = vld [vmem:[%s1 + $0x14] sm:$0xf]
      %v320 = vld [vmem:[%s1 + $0x18] sm:$0xf]
      %v321 = vld [vmem:[%s1 + $0x1c] sm:$0xf]
      %v322 = vld [vmem:[%s1 + $0x20] sm:$0xf]
      %v435 = vunpack.c.l.b16 %v202
      %v436 = vunpack.c.l.b16 %v203
      %v437 = vunpack.c.l.b16 %v204
      %v438 = vunpack.c.l.b16 %v205
      %v439 = vunpack.c.l.b16 %v206
      %v440 = vunpack.c.l.b16 %v207
      %v441 = vunpack.c.l.b16 %v208
      %v442 = vunpack.c.l.b16 %v209
      %v443 = vunpack.c.l.b16 %v210
      %v444 = vunpack.c.l.b16 %v211
      %v445 = vunpack.c.l.b16 %v212
      %v446 = vunpack.c.l.b16 %v213
      %v447 = vunpack.c.l.b16 %v214
      %v448 = vunpack.c.l.b16 %v215
      %v449 = vunpack.c.l.b16 %v216
      %v450 = vunpack.c.l.b16 %v217
      %v451 = vunpack.c.l.b16 %v218
      %v452 = vunpack.c.l.b16 %v219
      %v453 = vunpack.c.l.b16 %v220
      %v454 = vunpack.c.l.b16 %v221
      %v455 = vunpack.c.l.b16 %v222
      %v456 = vunpack.c.l.b16 %v223
      %v457 = vunpack.c.l.b16 %v224
      %v458 = vunpack.c.l.b16 %v225
      %v459 = vunpack.c.l.b16 %v226
      %v460 = vunpack.c.l.b16 %v227
      %v461 = vunpack.c.l.b16 %v228
      %v462 = vunpack.c.l.b16 %v229
      %v463 = vunpack.c.l.b16 %v230
      %v464 = vunpack.c.l.b16 %v231
      %v465 = vunpack.c.l.b16 %v232
      %v466 = vunpack.c.l.b16 %v233
      %v467 = vunpack.c.l.b16 %v234
      %v468 = vunpack.c.l.b16 %v235
      %v469 = vunpack.c.l.b16 %v236
      %v470 = vunpack.c.l.b16 %v237
      %v471 = vunpack.c.l.b16 %v238
      %v472 = vunpack.c.l.b16 %v239
      %v473 = vunpack.c.l.b16 %v240
      %v474 = vunpack.c.l.b16 %v241
      %v475 = vunpack.c.l.b16 %v242
      %v476 = vunpack.c.l.b16 %v243
      %v477 = vunpack.c.l.b16 %v244
      %v478 = vunpack.c.l.b16 %v245
      %v479 = vunpack.c.l.b16 %v246
      %v480 = vunpack.c.l.b16 %v247
      %v481 = vunpack.c.l.b16 %v248
      %v482 = vunpack.c.l.b16 %v249
      %v483 = vunpack.c.l.b16 %v250
      %v484 = vunpack.c.l.b16 %v251
      %v485 = vunpack.c.l.b16 %v252
      %v486 = vunpack.c.l.b16 %v253
      %v487 = vunpack.c.l.b16 %v254
      %v488 = vunpack.c.l.b16 %v255
      %v489 = vunpack.c.l.b16 %v256
      %v490 = vunpack.c.l.b16 %v257
      %v491 = vunpack.c.l.b16 %v258
      %v492 = vunpack.c.l.b16 %v259
      %v493 = vunpack.c.l.b16 %v260
      %v494 = vunpack.c.l.b16 %v261
      %v495 = vunpack.c.l.b16 %v262
      %v496 = vunpack.c.l.b16 %v263
      %v497 = vunpack.c.l.b16 %v264
      %v498 = vunpack.c.l.b16 %v265
      %v499 = vunpack.c.l.b16 %v266
      %v500 = vunpack.c.l.b16 %v267
      %v501 = vunpack.c.l.b16 %v268
      %v502 = vunpack.c.l.b16 %v269
      %v503 = vunpack.c.l.b16 %v270
      %v504 = vunpack.c.l.b16 %v271
      %v505 = vunpack.c.l.b16 %v272
      %v506 = vunpack.c.l.b16 %v273
      %v507 = vunpack.c.l.b16 %v274
      %v508 = vunpack.c.l.b16 %v275
      %v509 = vunpack.c.l.b16 %v276
      %v510 = vunpack.c.l.b16 %v277
      %v511 = vunpack.c.l.b16 %v278
      %v512 = vunpack.c.l.b16 %v279
      %v513 = vunpack.c.l.b16 %v280
      %v514 = vunpack.c.l.b16 %v281
      %v515 = vunpack.c.l.b16 %v282
      %v516 = vunpack.c.l.b16 %v283
      %v517 = vunpack.c.l.b16 %v284
      %v518 = vunpack.c.l.b16 %v285
      %v519 = vunpack.c.l.b16 %v286
      %v520 = vunpack.c.l.b16 %v287
      %v521 = vunpack.c.l.b16 %v288
      %v522 = vunpack.c.l.b16 %v289
      %v523 = vunpack.c.l.b16 %v290
      %v524 = vunpack.c.l.b16 %v291
      %v525 = vunpack.c.l.b16 %v292
      %v526 = vunpack.c.l.b16 %v293
      %v527 = vunpack.c.l.b16 %v294
      %v528 = vunpack.c.l.b16 %v295
      %v529 = vunpack.c.l.b16 %v296
      %v530 = vunpack.c.l.b16 %v297
      %v531 = vunpack.c.l.b16 %v298
      %v532 = vunpack.c.l.b16 %v299
      %v533 = vunpack.c.l.b16 %v300
      %v534 = vunpack.c.l.b16 %v301
      %v535 = vunpack.c.l.b16 %v302
      %v536 = vunpack.c.l.b16 %v303
      %v537 = vunpack.c.l.b16 %v304
      %v538 = vunpack.c.l.b16 %v305
      %v539 = vunpack.c.l.b16 %v306
      %v540 = vunpack.c.l.b16 %v307
      %v541 = vunpack.c.l.b16 %v308
      %v542 = vunpack.c.l.b16 %v309
      %v543 = vunpack.c.l.b16 %v310
      %v544 = vunpack.c.l.b16 %v311
      %v545 = vunpack.c.l.b16 %v312
      %v546 = vunpack.c.l.b16 %v313
      %v547 = vpack.c.b16 %v436, %v435
      %v548 = vpack.c.b16 %v438, %v437
      %v549 = vpack.c.b16 %v440, %v439
      %v550 = vpack.c.b16 %v442, %v441
      %v551 = vpack.c.b16 %v444, %v443
      %v552 = vpack.c.b16 %v446, %v445
      %v553 = vpack.c.b16 %v448, %v447
      %v554 = vpack.c.b16 %v450, %v449
      %v555 = vpack.c.b16 %v452, %v451
      %v556 = vpack.c.b16 %v454, %v453
      %v557 = vpack.c.b16 %v456, %v455
      %v558 = vpack.c.b16 %v458, %v457
      %v559 = vpack.c.b16 %v460, %v459
      %v560 = vpack.c.b16 %v462, %v461
      %v561 = vpack.c.b16 %v464, %v463
      %v562 = vpack.c.b16 %v466, %v465
      %v563 = vpack.c.b16 %v468, %v467
      %v564 = vpack.c.b16 %v470, %v469
      %v565 = vpack.c.b16 %v472, %v471
      %v566 = vpack.c.b16 %v474, %v473
      %v567 = vpack.c.b16 %v476, %v475
      %v568 = vpack.c.b16 %v478, %v477
      %v569 = vpack.c.b16 %v480, %v479
      %v570 = vpack.c.b16 %v482, %v481
      %v571 = vpack.c.b16 %v484, %v483
      %v572 = vpack.c.b16 %v486, %v485
      %v573 = vpack.c.b16 %v488, %v487
      %v574 = vpack.c.b16 %v490, %v489
      %v575 = vpack.c.b16 %v492, %v491
      %v576 = vpack.c.b16 %v494, %v493
      %v577 = vpack.c.b16 %v496, %v495
      %v578 = vpack.c.b16 %v498, %v497
      %v579 = vpack.c.b16 %v500, %v499
      %v580 = vpack.c.b16 %v502, %v501
      %v581 = vpack.c.b16 %v504, %v503
      %v582 = vpack.c.b16 %v506, %v505
      %v583 = vpack.c.b16 %v508, %v507
      %v584 = vpack.c.b16 %v510, %v509
      %v585 = vpack.c.b16 %v512, %v511
      %v586 = vpack.c.b16 %v514, %v513
      %v587 = vpack.c.b16 %v516, %v515
      %v588 = vpack.c.b16 %v518, %v517
      %v589 = vpack.c.b16 %v520, %v519
      %v590 = vpack.c.b16 %v522, %v521
      %v591 = vpack.c.b16 %v524, %v523
      %v592 = vpack.c.b16 %v526, %v525
      %v593 = vpack.c.b16 %v528, %v527
      %v594 = vpack.c.b16 %v530, %v529
      %v595 = vpack.c.b16 %v532, %v531
      %v596 = vpack.c.b16 %v534, %v533
      %v597 = vpack.c.b16 %v536, %v535
      %v598 = vpack.c.b16 %v538, %v537
      %v599 = vpack.c.b16 %v540, %v539
      %v600 = vpack.c.b16 %v542, %v541
      %v601 = vpack.c.b16 %v544, %v543
      %v602 = vpack.c.b16 %v546, %v545
      %v612 = vunpack.c.l.b16 %v314
      %v613 = vunpack.c.l.b16 %v315
      %v614 = vunpack.c.l.b16 %v316
      %v615 = vunpack.c.l.b16 %v317
      %v616 = vunpack.c.l.b16 %v318
      %v617 = vunpack.c.l.b16 %v319
      %v618 = vunpack.c.l.b16 %v320
      %v619 = vunpack.c.l.b16 %v321
      %v620 = vunpack.c.l.b16 %v322
      %v621 = vpack.c.b16 %v613, %v612
      %v622 = vpack.c.b16 %v615, %v614
      %v623 = vpack.c.b16 %v617, %v616
      %v624 = vpack.c.b16 %v619, %v618
      %v625 = vpack.c.b16 %v620, %v620
      %vm630 = vcmask 588800
      %v632 = vsel %vm630, %v547, 0
      %v635 = vsel %vm630, %v548, 0
      %v638 = vsel %vm630, %v549, 0
      %v641 = vsel %vm630, %v550, 0
      %v644 = vsel %vm630, %v551, 0
      %v647 = vsel %vm630, %v552, 0
      %v650 = vsel %vm630, %v553, 0
      %v653 = vsel %vm630, %v554, 0
      %v656 = vsel %vm630, %v555, 0
      %v659 = vsel %vm630, %v556, 0
      %v662 = vsel %vm630, %v557, 0
      %v665 = vsel %vm630, %v558, 0
      %v668 = vsel %vm630, %v559, 0
      %v671 = vsel %vm630, %v560, 0
      %v674 = vsel %vm630, %v561, 0
      %v677 = vsel %vm630, %v562, 0
      %v680 = vsel %vm630, %v563, 0
      %v683 = vsel %vm630, %v564, 0
      %v686 = vsel %vm630, %v565, 0
      %v689 = vsel %vm630, %v566, 0
      %v692 = vsel %vm630, %v567, 0
      %v695 = vsel %vm630, %v568, 0
      %v698 = vsel %vm630, %v569, 0
      %v701 = vsel %vm630, %v570, 0
      %v704 = vsel %vm630, %v571, 0
      %v707 = vsel %vm630, %v572, 0
      %v710 = vsel %vm630, %v573, 0
      %v713 = vsel %vm630, %v574, 0
      %v716 = vsel %vm630, %v575, 0
      %v719 = vsel %vm630, %v576, 0
      %v722 = vsel %vm630, %v577, 0
      %v725 = vsel %vm630, %v578, 0
      %v728 = vsel %vm630, %v579, 0
      %v731 = vsel %vm630, %v580, 0
      %v734 = vsel %vm630, %v581, 0
      %v737 = vsel %vm630, %v582, 0
      %v740 = vsel %vm630, %v583, 0
      %v743 = vsel %vm630, %v584, 0
      %v746 = vsel %vm630, %v585, 0
      %v749 = vsel %vm630, %v586, 0
      %v752 = vsel %vm630, %v587, 0
      %v755 = vsel %vm630, %v588, 0
      %v758 = vsel %vm630, %v589, 0
      %v761 = vsel %vm630, %v590, 0
      %v764 = vsel %vm630, %v591, 0
      %v767 = vsel %vm630, %v592, 0
      %v770 = vsel %vm630, %v593, 0
      %v773 = vsel %vm630, %v594, 0
      %v776 = vsel %vm630, %v595, 0
      %v779 = vsel %vm630, %v596, 0
      %v782 = vsel %vm630, %v597, 0
      %v785 = vsel %vm630, %v598, 0
      %v788 = vsel %vm630, %v599, 0
      %v791 = vsel %vm630, %v600, 0
      %v794 = vsel %vm630, %v601, 0
      %v797 = vsel %vm630, %v602, 0
      %vm799 = vcmask 1043456
      %v801 = vsel %vm799, %v625, 0
      %803 = vmatprep.subr.bf16.mxu0 0
      %804 = vmatpush1.bf16.msra.mxu0 %v621
      %805 = vmatprep.subr.bf16.mxu0 0
      %806 = vmatpush1.bf16.msra.mxu0 %v622
      %807 = vmatprep.subr.bf16.mxu0 0
      %808 = vmatpush1.bf16.msra.mxu0 %v623
      %809 = vmatprep.subr.bf16.mxu0 0
      %810 = vmatpush1.bf16.msra.mxu0 %v624
      %811 = vmatprep.subr.bf16.mxu0 0
      %812 = vmatpush1.bf16.msra.mxu0 %v801
      %813 = vmatprep.subr.bf16.mxu0 0
      %814 = vmatpush1.bf16.msra.mxu0 0
      %815 = vmatprep.subr.bf16.mxu0 0
      %816 = vmatpush1.bf16.msra.mxu0 0
      %817 = vmatprep.subr.bf16.mxu0 0
      %818 = vmatpush1.bf16.msra.mxu0 0
      %819 = vmatprep.subr.bf16.mxu0 0
      %820 = vmatpush1.bf16.msra.mxu0 0
      %821 = vmatprep.subr.bf16.mxu0 0
      %822 = vmatpush1.bf16.msra.mxu0 0
      %823 = vmatprep.subr.bf16.mxu0 0
      %824 = vmatpush1.bf16.msra.mxu0 0
      %825 = vmatprep.subr.bf16.mxu0 0
      %826 = vmatpush1.bf16.msra.mxu0 0
      %827 = vmatprep.subr.bf16.mxu0 0
      %828 = vmatpush1.bf16.msra.mxu0 0
      %829 = vmatprep.subr.bf16.mxu0 0
      %830 = vmatpush1.bf16.msra.mxu0 0
      %831 = vmatprep.subr.bf16.mxu0 0
      %832 = vmatpush1.bf16.msra.mxu0 0
      %833 = vmatprep.subr.bf16.mxu0 0
      %834 = vmatpush1.bf16.msra.mxu0 0
      %835 = vmatprep.mubr.bf16.mxu0 0
      %836 = vmatmul.mubr.bf16.gmra.mrb[0].mxu0 %v632
      %v837 = vpop.f32.mrb[0].mxu0
      %v838 = vadd.f32 0.0, %v837
      %v839 = vpop.f32.mrb[0].mxu0
      %v840 = vpop.f32.mrb[0].mxu0
      %v841 = vadd.f32 0.0, %v840
      %v842 = vpop.f32.mrb[0].mxu0
      %843 = vmatprep.mubr.bf16.mxu0 0
      %844 = vmatmul.mubr.bf16.gmra.mrb[0].mxu0 %v635
      %v845 = vpop.f32.mrb[0].mxu0
      %v846 = vadd.f32 0.0, %v845
      %v847 = vpop.f32.mrb[0].mxu0
      %v848 = vpop.f32.mrb[0].mxu0
      %v849 = vadd.f32 0.0, %v848
      %v850 = vpop.f32.mrb[0].mxu0
      %851 = vmatprep.mubr.bf16.mxu0 0
      %852 = vmatmul.mubr.bf16.gmra.mrb[0].mxu0 %v638
      %v853 = vpop.f32.mrb[0].mxu0
      %v854 = vadd.f32 0.0, %v853
      %v855 = vpop.f32.mrb[0].mxu0
      %v856 = vpop.f32.mrb[0].mxu0
      %v857 = vadd.f32 0.0, %v856
      %v858 = vpop.f32.mrb[0].mxu0
      %859 = vmatprep.mubr.bf16.mxu0 0
      %860 = vmatmul.mubr.bf16.gmra.mrb[0].mxu0 %v641
      %v861 = vpop.f32.mrb[0].mxu0
      %v862 = vadd.f32 0.0, %v861
      %v863 = vpop.f32.mrb[0].mxu0
      %v864 = vpop.f32.mrb[0].mxu0
      %v865 = vadd.f32 0.0, %v864
      %v866 = vpop.f32.mrb[0].mxu0
      %867 = vmatprep.mubr.bf16.mxu0 0
      %868 = vmatmul.mubr.bf16.gmra.mrb[0].mxu0 %v644
      %v869 = vpop.f32.mrb[0].mxu0
      %v870 = vadd.f32 0.0, %v869
      %v871 = vpop.f32.mrb[0].mxu0
      %v872 = vpop.f32.mrb[0].mxu0
      %v873 = vadd.f32 0.0, %v872
      %v874 = vpop.f32.mrb[0].mxu0
      %875 = vmatprep.mubr.bf16.mxu0 0
      %876 = vmatmul.mubr.bf16.gmra.mrb[0].mxu0 %v647
      %v877 = vpop.f32.mrb[0].mxu0
      %v878 = vadd.f32 0.0, %v877
      %v879 = vpop.f32.mrb[0].mxu0
      %v880 = vpop.f32.mrb[0].mxu0
      %v881 = vadd.f32 0.0, %v880
      %v882 = vpop.f32.mrb[0].mxu0
      %883 = vmatprep.mubr.bf16.mxu0 0
      %884 = vmatmul.mubr.bf16.gmra.mrb[0].mxu0 %v650
      %v885 = vpop.f32.mrb[0].mxu0
      %v886 = vadd.f32 0.0, %v885
      %v887 = vpop.f32.mrb[0].mxu0
      %v888 = vpop.f32.mrb[0].mxu0
      %v889 = vadd.f32 0.0, %v888
      %v890 = vpop.f32.mrb[0].mxu0
      %891 = vmatprep.mubr.bf16.mxu0 0
      %892 = vmatmul.mubr.bf16.gmra.mrb[0].mxu0 %v653
      %v893 = vpop.f32.mrb[0].mxu0
      %v894 = vadd.f32 0.0, %v893
      %v895 = vpop.f32.mrb[0].mxu0
      %v896 = vpop.f32.mrb[0].mxu0
      %v897 = vadd.f32 0.0, %v896
      %v898 = vpop.f32.mrb[0].mxu0
      %899 = vmatprep.mubr.bf16.mxu0 0
      %900 = vmatmul.mubr.bf16.gmra.mrb[0].mxu0 %v656
      %v901 = vpop.f32.mrb[0].mxu0
      %v902 = vadd.f32 0.0, %v901
      %v903 = vpop.f32.mrb[0].mxu0
      %v904 = vpop.f32.mrb[0].mxu0
      %v905 = vadd.f32 0.0, %v904
      %v906 = vpop.f32.mrb[0].mxu0
      %907 = vmatprep.mubr.bf16.mxu0 0
      %908 = vmatmul.mubr.bf16.gmra.mrb[0].mxu0 %v659
      %v909 = vpop.f32.mrb[0].mxu0
      %v910 = vadd.f32 0.0, %v909
      %v911 = vpop.f32.mrb[0].mxu0
      %v912 = vpop.f32.mrb[0].mxu0
      %v913 = vadd.f32 0.0, %v912
      %v914 = vpop.f32.mrb[0].mxu0
      %915 = vmatprep.mubr.bf16.mxu0 0
      %916 = vmatmul.mubr.bf16.gmra.mrb[0].mxu0 %v662
      %v917 = vpop.f32.mrb[0].mxu0
      %v918 = vadd.f32 0.0, %v917
      %v919 = vpop.f32.mrb[0].mxu0
      %v920 = vpop.f32.mrb[0].mxu0
      %v921 = vadd.f32 0.0, %v920
      %v922 = vpop.f32.mrb[0].mxu0
      %923 = vmatprep.mubr.bf16.mxu0 0
      %924 = vmatmul.mubr.bf16.gmra.mrb[0].mxu0 %v665
      %v925 = vpop.f32.mrb[0].mxu0
      %v926 = vadd.f32 0.0, %v925
      %v927 = vpop.f32.mrb[0].mxu0
      %v928 = vpop.f32.mrb[0].mxu0
      %v929 = vadd.f32 0.0, %v928
      %v930 = vpop.f32.mrb[0].mxu0
      %931 = vmatprep.mubr.bf16.mxu0 0
      %932 = vmatmul.mubr.bf16.gmra.mrb[0].mxu0 %v668
      %v933 = vpop.f32.mrb[0].mxu0
      %v934 = vadd.f32 0.0, %v933
      %v935 = vpop.f32.mrb[0].mxu0
      %v936 = vpop.f32.mrb[0].mxu0
      %v937 = vadd.f32 0.0, %v936
      %v938 = vpop.f32.mrb[0].mxu0
      %939 = vmatprep.mubr.bf16.mxu0 0
      %940 = vmatmul.mubr.bf16.gmra.mrb[0].mxu0 %v671
      %v941 = vpop.f32.mrb[0].mxu0
      %v942 = vadd.f32 0.0, %v941
      %v943 = vpop.f32.mrb[0].mxu0
      %v944 = vpop.f32.mrb[0].mxu0
      %v945 = vadd.f32 0.0, %v944
      %v946 = vpop.f32.mrb[0].mxu0
      %947 = vmatprep.mubr.bf16.mxu0 0
      %948 = vmatmul.mubr.bf16.gmra.mrb[0].mxu0 %v674
      %v949 = vpop.f32.mrb[0].mxu0
      %v950 = vadd.f32 0.0, %v949
      %v951 = vpop.f32.mrb[0].mxu0
      %v952 = vpop.f32.mrb[0].mxu0
      %v953 = vadd.f32 0.0, %v952
      %v954 = vpop.f32.mrb[0].mxu0
      %955 = vmatprep.mubr.bf16.mxu0 0
      %956 = vmatmul.mubr.bf16.gmra.mrb[0].mxu0 %v677
      %v957 = vpop.f32.mrb[0].mxu0
      %v958 = vadd.f32 0.0, %v957
      %v959 = vpop.f32.mrb[0].mxu0
      %v960 = vpop.f32.mrb[0].mxu0
      %v961 = vadd.f32 0.0, %v960
      %v962 = vpop.f32.mrb[0].mxu0
      %963 = vmatprep.mubr.bf16.mxu0 0
      %964 = vmatmul.mubr.bf16.gmra.mrb[0].mxu0 %v680
      %v965 = vpop.f32.mrb[0].mxu0
      %v966 = vadd.f32 0.0, %v965
      %v967 = vpop.f32.mrb[0].mxu0
      %v968 = vpop.f32.mrb[0].mxu0
      %v969 = vadd.f32 0.0, %v968
      %v970 = vpop.f32.mrb[0].mxu0
      %971 = vmatprep.mubr.bf16.mxu0 0
      %972 = vmatmul.mubr.bf16.gmra.mrb[0].mxu0 %v683
      %v973 = vpop.f32.mrb[0].mxu0
      %v974 = vadd.f32 0.0, %v973
      %v975 = vpop.f32.mrb[0].mxu0
      %v976 = vpop.f32.mrb[0].mxu0
      %v977 = vadd.f32 0.0, %v976
      %v978 = vpop.f32.mrb[0].mxu0
      %979 = vmatprep.mubr.bf16.mxu0 0
      %980 = vmatmul.mubr.bf16.gmra.mrb[0].mxu0 %v686
      %v981 = vpop.f32.mrb[0].mxu0
      %v982 = vadd.f32 0.0, %v981
      %v983 = vpop.f32.mrb[0].mxu0
      %v984 = vpop.f32.mrb[0].mxu0
      %v985 = vadd.f32 0.0, %v984
      %v986 = vpop.f32.mrb[0].mxu0
      %987 = vmatprep.mubr.bf16.mxu0 0
      %988 = vmatmul.mubr.bf16.gmra.mrb[0].mxu0 %v689
      %v989 = vpop.f32.mrb[0].mxu0
      %v990 = vadd.f32 0.0, %v989
      %v991 = vpop.f32.mrb[0].mxu0
      %v992 = vpop.f32.mrb[0].mxu0
      %v993 = vadd.f32 0.0, %v992
      %v994 = vpop.f32.mrb[0].mxu0
      %995 = vmatprep.mubr.bf16.mxu0 0
      %996 = vmatmul.mubr.bf16.gmra.mrb[0].mxu0 %v692
      %v997 = vpop.f32.mrb[0].mxu0
      %v998 = vadd.f32 0.0, %v997
      %v999 = vpop.f32.mrb[0].mxu0
      %v1000 = vpop.f32.mrb[0].mxu0
      %v1001 = vadd.f32 0.0, %v1000
      %v1002 = vpop.f32.mrb[0].mxu0
      %1003 = vmatprep.mubr.bf16.mxu0 0
      %1004 = vmatmul.mubr.bf16.gmra.mrb[0].mxu0 %v695
      %v1005 = vpop.f32.mrb[0].mxu0
      %v1006 = vadd.f32 0.0, %v1005
      %v1007 = vpop.f32.mrb[0].mxu0
      %v1008 = vpop.f32.mrb[0].mxu0
      %v1009 = vadd.f32 0.0, %v1008
      %v1010 = vpop.f32.mrb[0].mxu0
      %1011 = vmatprep.mubr.bf16.mxu0 0
      %1012 = vmatmul.mubr.bf16.gmra.mrb[0].mxu0 %v698
      %v1013 = vpop.f32.mrb[0].mxu0
      %v1014 = vadd.f32 0.0, %v1013
      %v1015 = vpop.f32.mrb[0].mxu0
      %v1016 = vpop.f32.mrb[0].mxu0
      %v1017 = vadd.f32 0.0, %v1016
      %v1018 = vpop.f32.mrb[0].mxu0
      %1019 = vmatprep.mubr.bf16.mxu0 0
      %1020 = vmatmul.mubr.bf16.gmra.mrb[0].mxu0 %v701
      %v1021 = vpop.f32.mrb[0].mxu0
      %v1022 = vadd.f32 0.0, %v1021
      %v1023 = vpop.f32.mrb[0].mxu0
      %v1024 = vpop.f32.mrb[0].mxu0
      %v1025 = vadd.f32 0.0, %v1024
      %v1026 = vpop.f32.mrb[0].mxu0
      %1027 = vmatprep.mubr.bf16.mxu0 0
      %1028 = vmatmul.mubr.bf16.gmra.mrb[0].mxu0 %v704
      %v1029 = vpop.f32.mrb[0].mxu0
      %v1030 = vadd.f32 0.0, %v1029
      %v1031 = vpop.f32.mrb[0].mxu0
      %v1032 = vpop.f32.mrb[0].mxu0
      %v1033 = vadd.f32 0.0, %v1032
      %v1034 = vpop.f32.mrb[0].mxu0
      %1035 = vmatprep.mubr.bf16.mxu0 0
      %1036 = vmatmul.mubr.bf16.gmra.mrb[0].mxu0 %v707
      %v1037 = vpop.f32.mrb[0].mxu0
      %v1038 = vadd.f32 0.0, %v1037
      %v1039 = vpop.f32.mrb[0].mxu0
      %v1040 = vpop.f32.mrb[0].mxu0
      %v1041 = vadd.f32 0.0, %v1040
      %v1042 = vpop.f32.mrb[0].mxu0
      %1043 = vmatprep.mubr.bf16.mxu0 0
      %1044 = vmatmul.mubr.bf16.gmra.mrb[0].mxu0 %v710
      %v1045 = vpop.f32.mrb[0].mxu0
      %v1046 = vadd.f32 0.0, %v1045
      %v1047 = vpop.f32.mrb[0].mxu0
      %v1048 = vpop.f32.mrb[0].mxu0
      %v1049 = vadd.f32 0.0, %v1048
      %v1050 = vpop.f32.mrb[0].mxu0
      %1051 = vmatprep.mubr.bf16.mxu0 0
      %1052 = vmatmul.mubr.bf16.gmra.mrb[0].mxu0 %v713
      %v1053 = vpop.f32.mrb[0].mxu0
      %v1054 = vadd.f32 0.0, %v1053
      %v1055 = vpop.f32.mrb[0].mxu0
      %v1056 = vpop.f32.mrb[0].mxu0
      %v1057 = vadd.f32 0.0, %v1056
      %v1058 = vpop.f32.mrb[0].mxu0
      %1059 = vmatprep.mubr.bf16.mxu0 0
      %1060 = vmatmul.mubr.bf16.gmra.mrb[0].mxu0 %v716
      %v1061 = vpop.f32.mrb[0].mxu0
      %v1062 = vadd.f32 0.0, %v1061
      %v1063 = vpop.f32.mrb[0].mxu0
      %v1064 = vpop.f32.mrb[0].mxu0
      %v1065 = vadd.f32 0.0, %v1064
      %v1066 = vpop.f32.mrb[0].mxu0
      %1067 = vmatprep.mubr.bf16.mxu0 0
      %1068 = vmatmul.mubr.bf16.gmra.mrb[0].mxu0 %v719
      %v1069 = vpop.f32.mrb[0].mxu0
      %v1070 = vadd.f32 0.0, %v1069
      %v1071 = vpop.f32.mrb[0].mxu0
      %v1072 = vpop.f32.mrb[0].mxu0
      %v1073 = vadd.f32 0.0, %v1072
      %v1074 = vpop.f32.mrb[0].mxu0
      %1075 = vmatprep.mubr.bf16.mxu0 0
      %1076 = vmatmul.mubr.bf16.gmra.mrb[0].mxu0 %v722
      %v1077 = vpop.f32.mrb[0].mxu0
      %v1078 = vadd.f32 0.0, %v1077
      %v1079 = vpop.f32.mrb[0].mxu0
      %v1080 = vpop.f32.mrb[0].mxu0
      %v1081 = vadd.f32 0.0, %v1080
      %v1082 = vpop.f32.mrb[0].mxu0
      %1083 = vmatprep.mubr.bf16.mxu0 0
      %1084 = vmatmul.mubr.bf16.gmra.mrb[0].mxu0 %v725
      %v1085 = vpop.f32.mrb[0].mxu0
      %v1086 = vadd.f32 0.0, %v1085
      %v1087 = vpop.f32.mrb[0].mxu0
      %v1088 = vpop.f32.mrb[0].mxu0
      %v1089 = vadd.f32 0.0, %v1088
      %v1090 = vpop.f32.mrb[0].mxu0
      %1091 = vmatprep.mubr.bf16.mxu0 0
      %1092 = vmatmul.mubr.bf16.gmra.mrb[0].mxu0 %v728
      %v1093 = vpop.f32.mrb[0].mxu0
      %v1094 = vadd.f32 0.0, %v1093
      %v1095 = vpop.f32.mrb[0].mxu0
      %v1096 = vpop.f32.mrb[0].mxu0
      %v1097 = vadd.f32 0.0, %v1096
      %v1098 = vpop.f32.mrb[0].mxu0
      %1099 = vmatprep.mubr.bf16.mxu0 0
      %1100 = vmatmul.mubr.bf16.gmra.mrb[0].mxu0 %v731
      %v1101 = vpop.f32.mrb[0].mxu0
      %v1102 = vadd.f32 0.0, %v1101
      %v1103 = vpop.f32.mrb[0].mxu0
      %v1104 = vpop.f32.mrb[0].mxu0
      %v1105 = vadd.f32 0.0, %v1104
      %v1106 = vpop.f32.mrb[0].mxu0
      %1107 = vmatprep.mubr.bf16.mxu0 0
      %1108 = vmatmul.mubr.bf16.gmra.mrb[0].mxu0 %v734
      %v1109 = vpop.f32.mrb[0].mxu0
      %v1110 = vadd.f32 0.0, %v1109
      %v1111 = vpop.f32.mrb[0].mxu0
      %v1112 = vpop.f32.mrb[0].mxu0
      %v1113 = vadd.f32 0.0, %v1112
      %v1114 = vpop.f32.mrb[0].mxu0
      %1115 = vmatprep.mubr.bf16.mxu0 0
      %1116 = vmatmul.mubr.bf16.gmra.mrb[0].mxu0 %v737
      %v1117 = vpop.f32.mrb[0].mxu0
      %v1118 = vadd.f32 0.0, %v1117
      %v1119 = vpop.f32.mrb[0].mxu0
      %v1120 = vpop.f32.mrb[0].mxu0
      %v1121 = vadd.f32 0.0, %v1120
      %v1122 = vpop.f32.mrb[0].mxu0
      %1123 = vmatprep.mubr.bf16.mxu0 0
      %1124 = vmatmul.mubr.bf16.gmra.mrb[0].mxu0 %v740
      %v1125 = vpop.f32.mrb[0].mxu0
      %v1126 = vadd.f32 0.0, %v1125
      %v1127 = vpop.f32.mrb[0].mxu0
      %v1128 = vpop.f32.mrb[0].mxu0
      %v1129 = vadd.f32 0.0, %v1128
      %v1130 = vpop.f32.mrb[0].mxu0
      %1131 = vmatprep.mubr.bf16.mxu0 0
      %1132 = vmatmul.mubr.bf16.gmra.mrb[0].mxu0 %v743
      %v1133 = vpop.f32.mrb[0].mxu0
      %v1134 = vadd.f32 0.0, %v1133
      %v1135 = vpop.f32.mrb[0].mxu0
      %v1136 = vpop.f32.mrb[0].mxu0
      %v1137 = vadd.f32 0.0, %v1136
      %v1138 = vpop.f32.mrb[0].mxu0
      %1139 = vmatprep.mubr.bf16.mxu0 0
      %1140 = vmatmul.mubr.bf16.gmra.mrb[0].mxu0 %v746
      %v1141 = vpop.f32.mrb[0].mxu0
      %v1142 = vadd.f32 0.0, %v1141
      %v1143 = vpop.f32.mrb[0].mxu0
      %v1144 = vpop.f32.mrb[0].mxu0
      %v1145 = vadd.f32 0.0, %v1144
      %v1146 = vpop.f32.mrb[0].mxu0
      %1147 = vmatprep.mubr.bf16.mxu0 0
      %1148 = vmatmul.mubr.bf16.gmra.mrb[0].mxu0 %v749
      %v1149 = vpop.f32.mrb[0].mxu0
      %v1150 = vadd.f32 0.0, %v1149
      %v1151 = vpop.f32.mrb[0].mxu0
      %v1152 = vpop.f32.mrb[0].mxu0
      %v1153 = vadd.f32 0.0, %v1152
      %v1154 = vpop.f32.mrb[0].mxu0
      %1155 = vmatprep.mubr.bf16.mxu0 0
      %1156 = vmatmul.mubr.bf16.gmra.mrb[0].mxu0 %v752
      %v1157 = vpop.f32.mrb[0].mxu0
      %v1158 = vadd.f32 0.0, %v1157
      %v1159 = vpop.f32.mrb[0].mxu0
      %v1160 = vpop.f32.mrb[0].mxu0
      %v1161 = vadd.f32 0.0, %v1160
      %v1162 = vpop.f32.mrb[0].mxu0
      %1163 = vmatprep.mubr.bf16.mxu0 0
      %1164 = vmatmul.mubr.bf16.gmra.mrb[0].mxu0 %v755
      %v1165 = vpop.f32.mrb[0].mxu0
      %v1166 = vadd.f32 0.0, %v1165
      %v1167 = vpop.f32.mrb[0].mxu0
      %v1168 = vpop.f32.mrb[0].mxu0
      %v1169 = vadd.f32 0.0, %v1168
      %v1170 = vpop.f32.mrb[0].mxu0
      %1171 = vmatprep.mubr.bf16.mxu0 0
      %1172 = vmatmul.mubr.bf16.gmra.mrb[0].mxu0 %v758
      %v1173 = vpop.f32.mrb[0].mxu0
      %v1174 = vadd.f32 0.0, %v1173
      %v1175 = vpop.f32.mrb[0].mxu0
      %v1176 = vpop.f32.mrb[0].mxu0
      %v1177 = vadd.f32 0.0, %v1176
      %v1178 = vpop.f32.mrb[0].mxu0
      %1179 = vmatprep.mubr.bf16.mxu0 0
      %1180 = vmatmul.mubr.bf16.gmra.mrb[0].mxu0 %v761
      %v1181 = vpop.f32.mrb[0].mxu0
      %v1182 = vadd.f32 0.0, %v1181
      %v1183 = vpop.f32.mrb[0].mxu0
      %v1184 = vpop.f32.mrb[0].mxu0
      %v1185 = vadd.f32 0.0, %v1184
      %v1186 = vpop.f32.mrb[0].mxu0
      %1187 = vmatprep.mubr.bf16.mxu0 0
      %1188 = vmatmul.mubr.bf16.gmra.mrb[0].mxu0 %v764
      %v1189 = vpop.f32.mrb[0].mxu0
      %v1190 = vadd.f32 0.0, %v1189
      %v1191 = vpop.f32.mrb[0].mxu0
      %v1192 = vpop.f32.mrb[0].mxu0
      %v1193 = vadd.f32 0.0, %v1192
      %v1194 = vpop.f32.mrb[0].mxu0
      %1195 = vmatprep.mubr.bf16.mxu0 0
      %1196 = vmatmul.mubr.bf16.gmra.mrb[0].mxu0 %v767
      %v1197 = vpop.f32.mrb[0].mxu0
      %v1198 = vadd.f32 0.0, %v1197
      %v1199 = vpop.f32.mrb[0].mxu0
      %v1200 = vpop.f32.mrb[0].mxu0
      %v1201 = vadd.f32 0.0, %v1200
      %v1202 = vpop.f32.mrb[0].mxu0
      %1203 = vmatprep.mubr.bf16.mxu0 0
      %1204 = vmatmul.mubr.bf16.gmra.mrb[0].mxu0 %v770
      %v1205 = vpop.f32.mrb[0].mxu0
      %v1206 = vadd.f32 0.0, %v1205
      %v1207 = vpop.f32.mrb[0].mxu0
      %v1208 = vpop.f32.mrb[0].mxu0
      %v1209 = vadd.f32 0.0, %v1208
      %v1210 = vpop.f32.mrb[0].mxu0
      %1211 = vmatprep.mubr.bf16.mxu0 0
      %1212 = vmatmul.mubr.bf16.gmra.mrb[0].mxu0 %v773
      %v1213 = vpop.f32.mrb[0].mxu0
      %v1214 = vadd.f32 0.0, %v1213
      %v1215 = vpop.f32.mrb[0].mxu0
      %v1216 = vpop.f32.mrb[0].mxu0
      %v1217 = vadd.f32 0.0, %v1216
      %v1218 = vpop.f32.mrb[0].mxu0
      %1219 = vmatprep.mubr.bf16.mxu0 0
      %1220 = vmatmul.mubr.bf16.gmra.mrb[0].mxu0 %v776
      %v1221 = vpop.f32.mrb[0].mxu0
      %v1222 = vadd.f32 0.0, %v1221
      %v1223 = vpop.f32.mrb[0].mxu0
      %v1224 = vpop.f32.mrb[0].mxu0
      %v1225 = vadd.f32 0.0, %v1224
      %v1226 = vpop.f32.mrb[0].mxu0
      %1227 = vmatprep.mubr.bf16.mxu0 0
      %1228 = vmatmul.mubr.bf16.gmra.mrb[0].mxu0 %v779
      %v1229 = vpop.f32.mrb[0].mxu0
      %v1230 = vadd.f32 0.0, %v1229
      %v1231 = vpop.f32.mrb[0].mxu0
      %v1232 = vpop.f32.mrb[0].mxu0
      %v1233 = vadd.f32 0.0, %v1232
      %v1234 = vpop.f32.mrb[0].mxu0
      %1235 = vmatprep.mubr.bf16.mxu0 0
      %1236 = vmatmul.mubr.bf16.gmra.mrb[0].mxu0 %v782
      %v1237 = vpop.f32.mrb[0].mxu0
      %v1238 = vadd.f32 0.0, %v1237
      %v1239 = vpop.f32.mrb[0].mxu0
      %v1240 = vpop.f32.mrb[0].mxu0
      %v1241 = vadd.f32 0.0, %v1240
      %v1242 = vpop.f32.mrb[0].mxu0
      %1243 = vmatprep.mubr.bf16.mxu0 0
      %1244 = vmatmul.mubr.bf16.gmra.mrb[0].mxu0 %v785
      %v1245 = vpop.f32.mrb[0].mxu0
      %v1246 = vadd.f32 0.0, %v1245
      %v1247 = vpop.f32.mrb[0].mxu0
      %v1248 = vpop.f32.mrb[0].mxu0
      %v1249 = vadd.f32 0.0, %v1248
      %v1250 = vpop.f32.mrb[0].mxu0
      %1251 = vmatprep.mubr.bf16.mxu0 0
      %1252 = vmatmul.mubr.bf16.gmra.mrb[0].mxu0 %v788
      %v1253 = vpop.f32.mrb[0].mxu0
      %v1254 = vadd.f32 0.0, %v1253
      %v1255 = vpop.f32.mrb[0].mxu0
      %v1256 = vpop.f32.mrb[0].mxu0
      %v1257 = vadd.f32 0.0, %v1256
      %v1258 = vpop.f32.mrb[0].mxu0
      %1259 = vmatprep.mubr.bf16.mxu0 0
      %1260 = vmatmul.mubr.bf16.gmra.mrb[0].mxu0 %v791
      %v1261 = vpop.f32.mrb[0].mxu0
      %v1262 = vadd.f32 0.0, %v1261
      %v1263 = vpop.f32.mrb[0].mxu0
      %v1264 = vpop.f32.mrb[0].mxu0
      %v1265 = vadd.f32 0.0, %v1264
      %v1266 = vpop.f32.mrb[0].mxu0
      %1267 = vmatprep.mubr.bf16.mxu0 0
      %1268 = vmatmul.mubr.bf16.gmra.mrb[0].mxu0 %v794
      %v1269 = vpop.f32.mrb[0].mxu0
      %v1270 = vadd.f32 0.0, %v1269
      %v1271 = vpop.f32.mrb[0].mxu0
      %v1272 = vpop.f32.mrb[0].mxu0
      %v1273 = vadd.f32 0.0, %v1272
      %v1274 = vpop.f32.mrb[0].mxu0
      %1275 = vmatprep.mubr.bf16.mxu0 0
      %1276 = vmatmul.mubr.bf16.gmra.mrb[0].mxu0 %v797
      %v1277 = vpop.f32.mrb[0].mxu0
      %v1278 = vadd.f32 0.0, %v1277
      %v1279 = vpop.f32.mrb[0].mxu0
      %v1280 = vpop.f32.mrb[0].mxu0
      %v1281 = vadd.f32 0.0, %v1280
      %v1282 = vpop.f32.mrb[0].mxu0
      %1283 = vdwg.mxu0
      %v1284 = vld [vmem:[%s2] sm:$0x1]
      %v1286 = vlaneseq
      %v1287 = vshrl.u32 %v1286, 7
      %v1288 = vsub.s32 0, %v1287
      %v1289 = vrot.slane %v1284, %v1288
      %v1291 = vmul.f32 %v838, %v1289
      %v1292 = vmul.f32 %v841, %v1289
      %v1293 = vmul.f32 %v846, %v1289
      %v1294 = vmul.f32 %v849, %v1289
      %v1295 = vmul.f32 %v854, %v1289
      %v1296 = vmul.f32 %v857, %v1289
      %v1297 = vmul.f32 %v862, %v1289
      %v1298 = vmul.f32 %v865, %v1289
      %v1299 = vmul.f32 %v870, %v1289
      %v1300 = vmul.f32 %v873, %v1289
      %v1301 = vmul.f32 %v878, %v1289
      %v1302 = vmul.f32 %v881, %v1289
      %v1303 = vmul.f32 %v886, %v1289
      %v1304 = vmul.f32 %v889, %v1289
      %v1305 = vmul.f32 %v894, %v1289
      %v1306 = vmul.f32 %v897, %v1289
      %v1307 = vmul.f32 %v902, %v1289
      %v1308 = vmul.f32 %v905, %v1289
      %v1309 = vmul.f32 %v910, %v1289
      %v1310 = vmul.f32 %v913, %v1289
      %v1311 = vmul.f32 %v918, %v1289
      %v1312 = vmul.f32 %v921, %v1289
      %v1313 = vmul.f32 %v926, %v1289
      %v1314 = vmul.f32 %v929, %v1289
      %v1315 = vmul.f32 %v934, %v1289
      %v1316 = vmul.f32 %v937, %v1289
      %v1317 = vmul.f32 %v942, %v1289
      %v1318 = vmul.f32 %v945, %v1289
      %v1319 = vmul.f32 %v950, %v1289
      %v1320 = vmul.f32 %v953, %v1289
      %v1321 = vmul.f32 %v958, %v1289
      %v1322 = vmul.f32 %v961, %v1289
      %v1323 = vmul.f32 %v966, %v1289
      %v1324 = vmul.f32 %v969, %v1289
      %v1325 = vmul.f32 %v974, %v1289
      %v1326 = vmul.f32 %v977, %v1289
      %v1327 = vmul.f32 %v982, %v1289
      %v1328 = vmul.f32 %v985, %v1289
      %v1329 = vmul.f32 %v990, %v1289
      %v1330 = vmul.f32 %v993, %v1289
      %v1331 = vmul.f32 %v998, %v1289
      %v1332 = vmul.f32 %v1001, %v1289
      %v1333 = vmul.f32 %v1006, %v1289
      %v1334 = vmul.f32 %v1009, %v1289
      %v1335 = vmul.f32 %v1014, %v1289
      %v1336 = vmul.f32 %v1017, %v1289
      %v1337 = vmul.f32 %v1022, %v1289
      %v1338 = vmul.f32 %v1025, %v1289
      %v1339 = vmul.f32 %v1030, %v1289
      %v1340 = vmul.f32 %v1033, %v1289
      %v1341 = vmul.f32 %v1038, %v1289
      %v1342 = vmul.f32 %v1041, %v1289
      %v1343 = vmul.f32 %v1046, %v1289
      %v1344 = vmul.f32 %v1049, %v1289
      %v1345 = vmul.f32 %v1054, %v1289
      %v1346 = vmul.f32 %v1057, %v1289
      %v1347 = vmul.f32 %v1062, %v1289
      %v1348 = vmul.f32 %v1065, %v1289
      %v1349 = vmul.f32 %v1070, %v1289
      %v1350 = vmul.f32 %v1073, %v1289
      %v1351 = vmul.f32 %v1078, %v1289
      %v1352 = vmul.f32 %v1081, %v1289
      %v1353 = vmul.f32 %v1086, %v1289
      %v1354 = vmul.f32 %v1089, %v1289
      %v1355 = vmul.f32 %v1094, %v1289
      %v1356 = vmul.f32 %v1097, %v1289
      %v1357 = vmul.f32 %v1102, %v1289
      %v1358 = vmul.f32 %v1105, %v1289
      %v1359 = vmul.f32 %v1110, %v1289
      %v1360 = vmul.f32 %v1113, %v1289
      %v1361 = vmul.f32 %v1118, %v1289
      %v1362 = vmul.f32 %v1121, %v1289
      %v1363 = vmul.f32 %v1126, %v1289
      %v1364 = vmul.f32 %v1129, %v1289
      %v1365 = vmul.f32 %v1134, %v1289
      %v1366 = vmul.f32 %v1137, %v1289
      %v1367 = vmul.f32 %v1142, %v1289
      %v1368 = vmul.f32 %v1145, %v1289
      %v1369 = vmul.f32 %v1150, %v1289
      %v1370 = vmul.f32 %v1153, %v1289
      %v1371 = vmul.f32 %v1158, %v1289
      %v1372 = vmul.f32 %v1161, %v1289
      %v1373 = vmul.f32 %v1166, %v1289
      %v1374 = vmul.f32 %v1169, %v1289
      %v1375 = vmul.f32 %v1174, %v1289
      %v1376 = vmul.f32 %v1177, %v1289
      %v1377 = vmul.f32 %v1182, %v1289
      %v1378 = vmul.f32 %v1185, %v1289
      %v1379 = vmul.f32 %v1190, %v1289
      %v1380 = vmul.f32 %v1193, %v1289
      %v1381 = vmul.f32 %v1198, %v1289
      %v1382 = vmul.f32 %v1201, %v1289
      %v1383 = vmul.f32 %v1206, %v1289
      %v1384 = vmul.f32 %v1209, %v1289
      %v1385 = vmul.f32 %v1214, %v1289
      %v1386 = vmul.f32 %v1217, %v1289
      %v1387 = vmul.f32 %v1222, %v1289
      %v1388 = vmul.f32 %v1225, %v1289
      %v1389 = vmul.f32 %v1230, %v1289
      %v1390 = vmul.f32 %v1233, %v1289
      %v1391 = vmul.f32 %v1238, %v1289
      %v1392 = vmul.f32 %v1241, %v1289
      %v1393 = vmul.f32 %v1246, %v1289
      %v1394 = vmul.f32 %v1249, %v1289
      %v1395 = vmul.f32 %v1254, %v1289
      %v1396 = vmul.f32 %v1257, %v1289
      %v1397 = vmul.f32 %v1262, %v1289
      %v1398 = vmul.f32 %v1265, %v1289
      %v1399 = vmul.f32 %v1270, %v1289
      %v1400 = vmul.f32 %v1273, %v1289
      %v1401 = vmul.f32 %v1278, %v1289
      %v1402 = vmul.f32 %v1281, %v1289
      %v1403 = vld [vmem:[%s3] sm:$0x1]
      %v1405 = vlaneseq
      %v1406 = vshrl.u32 %v1405, 7
      %v1407 = vsub.s32 0, %v1406
      %v1408 = vrot.slane %v1403, %v1407
      %v1410 = vadd.f32 %v1291, %v1408
      %v1411 = vadd.f32 %v1292, %v1408
      %v1412 = vadd.f32 %v1293, %v1408
      %v1413 = vadd.f32 %v1294, %v1408
      %v1414 = vadd.f32 %v1295, %v1408
      %v1415 = vadd.f32 %v1296, %v1408
      %v1416 = vadd.f32 %v1297, %v1408
      %v1417 = vadd.f32 %v1298, %v1408
      %v1418 = vadd.f32 %v1299, %v1408
      %v1419 = vadd.f32 %v1300, %v1408
      %v1420 = vadd.f32 %v1301, %v1408
      %v1421 = vadd.f32 %v1302, %v1408
      %v1422 = vadd.f32 %v1303, %v1408
      %v1423 = vadd.f32 %v1304, %v1408
      %v1424 = vadd.f32 %v1305, %v1408
      %v1425 = vadd.f32 %v1306, %v1408
      %v1426 = vadd.f32 %v1307, %v1408
      %v1427 = vadd.f32 %v1308, %v1408
      %v1428 = vadd.f32 %v1309, %v1408
      %v1429 = vadd.f32 %v1310, %v1408
      %v1430 = vadd.f32 %v1311, %v1408
      %v1431 = vadd.f32 %v1312, %v1408
      %v1432 = vadd.f32 %v1313, %v1408
      %v1433 = vadd.f32 %v1314, %v1408
      %v1434 = vadd.f32 %v1315, %v1408
      %v1435 = vadd.f32 %v1316, %v1408
      %v1436 = vadd.f32 %v1317, %v1408
      %v1437 = vadd.f32 %v1318, %v1408
      %v1438 = vadd.f32 %v1319, %v1408
      %v1439 = vadd.f32 %v1320, %v1408
      %v1440 = vadd.f32 %v1321, %v1408
      %v1441 = vadd.f32 %v1322, %v1408
      %v1442 = vadd.f32 %v1323, %v1408
      %v1443 = vadd.f32 %v1324, %v1408
      %v1444 = vadd.f32 %v1325, %v1408
      %v1445 = vadd.f32 %v1326, %v1408
      %v1446 = vadd.f32 %v1327, %v1408
      %v1447 = vadd.f32 %v1328, %v1408
      %v1448 = vadd.f32 %v1329, %v1408
      %v1449 = vadd.f32 %v1330, %v1408
      %v1450 = vadd.f32 %v1331, %v1408
      %v1451 = vadd.f32 %v1332, %v1408
      %v1452 = vadd.f32 %v1333, %v1408
      %v1453 = vadd.f32 %v1334, %v1408
      %v1454 = vadd.f32 %v1335, %v1408
      %v1455 = vadd.f32 %v1336, %v1408
      %v1456 = vadd.f32 %v1337, %v1408
      %v1457 = vadd.f32 %v1338, %v1408
      %v1458 = vadd.f32 %v1339, %v1408
      %v1459 = vadd.f32 %v1340, %v1408
      %v1460 = vadd.f32 %v1341, %v1408
      %v1461 = vadd.f32 %v1342, %v1408
      %v1462 = vadd.f32 %v1343, %v1408
      %v1463 = vadd.f32 %v1344, %v1408
      %v1464 = vadd.f32 %v1345, %v1408
      %v1465 = vadd.f32 %v1346, %v1408
      %v1466 = vadd.f32 %v1347, %v1408
      %v1467 = vadd.f32 %v1348, %v1408
      %v1468 = vadd.f32 %v1349, %v1408
      %v1469 = vadd.f32 %v1350, %v1408
      %v1470 = vadd.f32 %v1351, %v1408
      %v1471 = vadd.f32 %v1352, %v1408
      %v1472 = vadd.f32 %v1353, %v1408
      %v1473 = vadd.f32 %v1354, %v1408
      %v1474 = vadd.f32 %v1355, %v1408
      %v1475 = vadd.f32 %v1356, %v1408
      %v1476 = vadd.f32 %v1357, %v1408
      %v1477 = vadd.f32 %v1358, %v1408
      %v1478 = vadd.f32 %v1359, %v1408
      %v1479 = vadd.f32 %v1360, %v1408
      %v1480 = vadd.f32 %v1361, %v1408
      %v1481 = vadd.f32 %v1362, %v1408
      %v1482 = vadd.f32 %v1363, %v1408
      %v1483 = vadd.f32 %v1364, %v1408
      %v1484 = vadd.f32 %v1365, %v1408
      %v1485 = vadd.f32 %v1366, %v1408
      %v1486 = vadd.f32 %v1367, %v1408
      %v1487 = vadd.f32 %v1368, %v1408
      %v1488 = vadd.f32 %v1369, %v1408
      %v1489 = vadd.f32 %v1370, %v1408
      %v1490 = vadd.f32 %v1371, %v1408
      %v1491 = vadd.f32 %v1372, %v1408
      %v1492 = vadd.f32 %v1373, %v1408
      %v1493 = vadd.f32 %v1374, %v1408
      %v1494 = vadd.f32 %v1375, %v1408
      %v1495 = vadd.f32 %v1376, %v1408
      %v1496 = vadd.f32 %v1377, %v1408
      %v1497 = vadd.f32 %v1378, %v1408
      %v1498 = vadd.f32 %v1379, %v1408
      %v1499 = vadd.f32 %v1380, %v1408
      %v1500 = vadd.f32 %v1381, %v1408
      %v1501 = vadd.f32 %v1382, %v1408
      %v1502 = vadd.f32 %v1383, %v1408
      %v1503 = vadd.f32 %v1384, %v1408
      %v1504 = vadd.f32 %v1385, %v1408
      %v1505 = vadd.f32 %v1386, %v1408
      %v1506 = vadd.f32 %v1387, %v1408
      %v1507 = vadd.f32 %v1388, %v1408
      %v1508 = vadd.f32 %v1389, %v1408
      %v1509 = vadd.f32 %v1390, %v1408
      %v1510 = vadd.f32 %v1391, %v1408
      %v1511 = vadd.f32 %v1392, %v1408
      %v1512 = vadd.f32 %v1393, %v1408
      %v1513 = vadd.f32 %v1394, %v1408
      %v1514 = vadd.f32 %v1395, %v1408
      %v1515 = vadd.f32 %v1396, %v1408
      %v1516 = vadd.f32 %v1397, %v1408
      %v1517 = vadd.f32 %v1398, %v1408
      %v1518 = vadd.f32 %v1399, %v1408
      %v1519 = vadd.f32 %v1400, %v1408
      %v1520 = vadd.f32 %v1401, %v1408
      %v1521 = vadd.f32 %v1402, %v1408
      %v1522 = vmax.f32 %v1410, 0.0
      %v1523 = vmax.f32 %v1411, 0.0
      %v1524 = vmax.f32 %v1412, 0.0
      %v1525 = vmax.f32 %v1413, 0.0
      %v1526 = vmax.f32 %v1414, 0.0
      %v1527 = vmax.f32 %v1415, 0.0
      %v1528 = vmax.f32 %v1416, 0.0
      %v1529 = vmax.f32 %v1417, 0.0
      %v1530 = vmax.f32 %v1418, 0.0
      %v1531 = vmax.f32 %v1419, 0.0
      %v1532 = vmax.f32 %v1420, 0.0
      %v1533 = vmax.f32 %v1421, 0.0
      %v1534 = vmax.f32 %v1422, 0.0
      %v1535 = vmax.f32 %v1423, 0.0
      %v1536 = vmax.f32 %v1424, 0.0
      %v1537 = vmax.f32 %v1425, 0.0
      %v1538 = vmax.f32 %v1426, 0.0
      %v1539 = vmax.f32 %v1427, 0.0
      %v1540 = vmax.f32 %v1428, 0.0
      %v1541 = vmax.f32 %v1429, 0.0
      %v1542 = vmax.f32 %v1430, 0.0
      %v1543 = vmax.f32 %v1431, 0.0
      %v1544 = vmax.f32 %v1432, 0.0
      %v1545 = vmax.f32 %v1433, 0.0
      %v1546 = vmax.f32 %v1434, 0.0
      %v1547 = vmax.f32 %v1435, 0.0
      %v1548 = vmax.f32 %v1436, 0.0
      %v1549 = vmax.f32 %v1437, 0.0
      %v1550 = vmax.f32 %v1438, 0.0
      %v1551 = vmax.f32 %v1439, 0.0
      %v1552 = vmax.f32 %v1440, 0.0
      %v1553 = vmax.f32 %v1441, 0.0
      %v1554 = vmax.f32 %v1442, 0.0
      %v1555 = vmax.f32 %v1443, 0.0
      %v1556 = vmax.f32 %v1444, 0.0
      %v1557 = vmax.f32 %v1445, 0.0
      %v1558 = vmax.f32 %v1446, 0.0
      %v1559 = vmax.f32 %v1447, 0.0
      %v1560 = vmax.f32 %v1448, 0.0
      %v1561 = vmax.f32 %v1449, 0.0
      %v1562 = vmax.f32 %v1450, 0.0
      %v1563 = vmax.f32 %v1451, 0.0
      %v1564 = vmax.f32 %v1452, 0.0
      %v1565 = vmax.f32 %v1453, 0.0
      %v1566 = vmax.f32 %v1454, 0.0
      %v1567 = vmax.f32 %v1455, 0.0
      %v1568 = vmax.f32 %v1456, 0.0
      %v1569 = vmax.f32 %v1457, 0.0
      %v1570 = vmax.f32 %v1458, 0.0
      %v1571 = vmax.f32 %v1459, 0.0
      %v1572 = vmax.f32 %v1460, 0.0
      %v1573 = vmax.f32 %v1461, 0.0
      %v1574 = vmax.f32 %v1462, 0.0
      %v1575 = vmax.f32 %v1463, 0.0
      %v1576 = vmax.f32 %v1464, 0.0
      %v1577 = vmax.f32 %v1465, 0.0
      %v1578 = vmax.f32 %v1466, 0.0
      %v1579 = vmax.f32 %v1467, 0.0
      %v1580 = vmax.f32 %v1468, 0.0
      %v1581 = vmax.f32 %v1469, 0.0
      %v1582 = vmax.f32 %v1470, 0.0
      %v1583 = vmax.f32 %v1471, 0.0
      %v1584 = vmax.f32 %v1472, 0.0
      %v1585 = vmax.f32 %v1473, 0.0
      %v1586 = vmax.f32 %v1474, 0.0
      %v1587 = vmax.f32 %v1475, 0.0
      %v1588 = vmax.f32 %v1476, 0.0
      %v1589 = vmax.f32 %v1477, 0.0
      %v1590 = vmax.f32 %v1478, 0.0
      %v1591 = vmax.f32 %v1479, 0.0
      %v1592 = vmax.f32 %v1480, 0.0
      %v1593 = vmax.f32 %v1481, 0.0
      %v1594 = vmax.f32 %v1482, 0.0
      %v1595 = vmax.f32 %v1483, 0.0
      %v1596 = vmax.f32 %v1484, 0.0
      %v1597 = vmax.f32 %v1485, 0.0
      %v1598 = vmax.f32 %v1486, 0.0
      %v1599 = vmax.f32 %v1487, 0.0
      %v1600 = vmax.f32 %v1488, 0.0
      %v1601 = vmax.f32 %v1489, 0.0
      %v1602 = vmax.f32 %v1490, 0.0
      %v1603 = vmax.f32 %v1491, 0.0
      %v1604 = vmax.f32 %v1492, 0.0
      %v1605 = vmax.f32 %v1493, 0.0
      %v1606 = vmax.f32 %v1494, 0.0
      %v1607 = vmax.f32 %v1495, 0.0
      %v1608 = vmax.f32 %v1496, 0.0
      %v1609 = vmax.f32 %v1497, 0.0
      %v1610 = vmax.f32 %v1498, 0.0
      %v1611 = vmax.f32 %v1499, 0.0
      %v1612 = vmax.f32 %v1500, 0.0
      %v1613 = vmax.f32 %v1501, 0.0
      %v1614 = vmax.f32 %v1502, 0.0
      %v1615 = vmax.f32 %v1503, 0.0
      %v1616 = vmax.f32 %v1504, 0.0
      %v1617 = vmax.f32 %v1505, 0.0
      %v1618 = vmax.f32 %v1506, 0.0
      %v1619 = vmax.f32 %v1507, 0.0
      %v1620 = vmax.f32 %v1508, 0.0
      %v1621 = vmax.f32 %v1509, 0.0
      %v1622 = vmax.f32 %v1510, 0.0
      %v1623 = vmax.f32 %v1511, 0.0
      %v1624 = vmax.f32 %v1512, 0.0
      %v1625 = vmax.f32 %v1513, 0.0
      %v1626 = vmax.f32 %v1514, 0.0
      %v1627 = vmax.f32 %v1515, 0.0
      %v1628 = vmax.f32 %v1516, 0.0
      %v1629 = vmax.f32 %v1517, 0.0
      %v1630 = vmax.f32 %v1518, 0.0
      %v1631 = vmax.f32 %v1519, 0.0
      %v1632 = vmax.f32 %v1520, 0.0
      %v1633 = vmax.f32 %v1521, 0.0
      %v1634 = vpack.c.bf16 %v1523, %v1522
      %v1635 = vpack.c.bf16 %v1525, %v1524
      %v1636 = vpack.c.bf16 %v1527, %v1526
      %v1637 = vpack.c.bf16 %v1529, %v1528
      %v1638 = vpack.c.bf16 %v1531, %v1530
      %v1639 = vpack.c.bf16 %v1533, %v1532
      %v1640 = vpack.c.bf16 %v1535, %v1534
      %v1641 = vpack.c.bf16 %v1537, %v1536
      %v1642 = vpack.c.bf16 %v1539, %v1538
      %v1643 = vpack.c.bf16 %v1541, %v1540
      %v1644 = vpack.c.bf16 %v1543, %v1542
      %v1645 = vpack.c.bf16 %v1545, %v1544
      %v1646 = vpack.c.bf16 %v1547, %v1546
      %v1647 = vpack.c.bf16 %v1549, %v1548
      %v1648 = vpack.c.bf16 %v1551, %v1550
      %v1649 = vpack.c.bf16 %v1553, %v1552
      %v1650 = vpack.c.bf16 %v1555, %v1554
      %v1651 = vpack.c.bf16 %v1557, %v1556
      %v1652 = vpack.c.bf16 %v1559, %v1558
      %v1653 = vpack.c.bf16 %v1561, %v1560
      %v1654 = vpack.c.bf16 %v1563, %v1562
      %v1655 = vpack.c.bf16 %v1565, %v1564
      %v1656 = vpack.c.bf16 %v1567, %v1566
      %v1657 = vpack.c.bf16 %v1569, %v1568
      %v1658 = vpack.c.bf16 %v1571, %v1570
      %v1659 = vpack.c.bf16 %v1573, %v1572
      %v1660 = vpack.c.bf16 %v1575, %v1574
      %v1661 = vpack.c.bf16 %v1577, %v1576
      %v1662 = vpack.c.bf16 %v1579, %v1578
      %v1663 = vpack.c.bf16 %v1581, %v1580
      %v1664 = vpack.c.bf16 %v1583, %v1582
      %v1665 = vpack.c.bf16 %v1585, %v1584
      %v1666 = vpack.c.bf16 %v1587, %v1586
      %v1667 = vpack.c.bf16 %v1589, %v1588
      %v1668 = vpack.c.bf16 %v1591, %v1590
      %v1669 = vpack.c.bf16 %v1593, %v1592
      %v1670 = vpack.c.bf16 %v1595, %v1594
      %v1671 = vpack.c.bf16 %v1597, %v1596
      %v1672 = vpack.c.bf16 %v1599, %v1598
      %v1673 = vpack.c.bf16 %v1601, %v1600
      %v1674 = vpack.c.bf16 %v1603, %v1602
      %v1675 = vpack.c.bf16 %v1605, %v1604
      %v1676 = vpack.c.bf16 %v1607, %v1606
      %v1677 = vpack.c.bf16 %v1609, %v1608
      %v1678 = vpack.c.bf16 %v1611, %v1610
      %v1679 = vpack.c.bf16 %v1613, %v1612
      %v1680 = vpack.c.bf16 %v1615, %v1614
      %v1681 = vpack.c.bf16 %v1617, %v1616
      %v1682 = vpack.c.bf16 %v1619, %v1618
      %v1683 = vpack.c.bf16 %v1621, %v1620
      %v1684 = vpack.c.bf16 %v1623, %v1622
      %v1685 = vpack.c.bf16 %v1625, %v1624
      %v1686 = vpack.c.bf16 %v1627, %v1626
      %v1687 = vpack.c.bf16 %v1629, %v1628
      %v1688 = vpack.c.bf16 %v1631, %v1630
      %v1689 = vpack.c.bf16 %v1633, %v1632
      %v1746 = vunpack.c.l.b16 %v1634
      %v1747 = vunpack.c.h.b16 %v1634
      %v1748 = vunpack.c.l.b16 %v1635
      %v1749 = vunpack.c.h.b16 %v1635
      %v1750 = vunpack.c.l.b16 %v1636
      %v1751 = vunpack.c.h.b16 %v1636
      %v1752 = vunpack.c.l.b16 %v1637
      %v1753 = vunpack.c.h.b16 %v1637
      %v1754 = vunpack.c.l.b16 %v1638
      %v1755 = vunpack.c.h.b16 %v1638
      %v1756 = vunpack.c.l.b16 %v1639
      %v1757 = vunpack.c.h.b16 %v1639
      %v1758 = vunpack.c.l.b16 %v1640
      %v1759 = vunpack.c.h.b16 %v1640
      %v1760 = vunpack.c.l.b16 %v1641
      %v1761 = vunpack.c.h.b16 %v1641
      %v1762 = vunpack.c.l.b16 %v1642
      %v1763 = vunpack.c.h.b16 %v1642
      %v1764 = vunpack.c.l.b16 %v1643
      %v1765 = vunpack.c.h.b16 %v1643
      %v1766 = vunpack.c.l.b16 %v1644
      %v1767 = vunpack.c.h.b16 %v1644
      %v1768 = vunpack.c.l.b16 %v1645
      %v1769 = vunpack.c.h.b16 %v1645
      %v1770 = vunpack.c.l.b16 %v1646
      %v1771 = vunpack.c.h.b16 %v1646
      %v1772 = vunpack.c.l.b16 %v1647
      %v1773 = vunpack.c.h.b16 %v1647
      %v1774 = vunpack.c.l.b16 %v1648
      %v1775 = vunpack.c.h.b16 %v1648
      %v1776 = vunpack.c.l.b16 %v1649
      %v1777 = vunpack.c.h.b16 %v1649
      %v1778 = vunpack.c.l.b16 %v1650
      %v1779 = vunpack.c.h.b16 %v1650
      %v1780 = vunpack.c.l.b16 %v1651
      %v1781 = vunpack.c.h.b16 %v1651
      %v1782 = vunpack.c.l.b16 %v1652
      %v1783 = vunpack.c.h.b16 %v1652
      %v1784 = vunpack.c.l.b16 %v1653
      %v1785 = vunpack.c.h.b16 %v1653
      %v1786 = vunpack.c.l.b16 %v1654
      %v1787 = vunpack.c.h.b16 %v1654
      %v1788 = vunpack.c.l.b16 %v1655
      %v1789 = vunpack.c.h.b16 %v1655
      %v1790 = vunpack.c.l.b16 %v1656
      %v1791 = vunpack.c.h.b16 %v1656
      %v1792 = vunpack.c.l.b16 %v1657
      %v1793 = vunpack.c.h.b16 %v1657
      %v1794 = vunpack.c.l.b16 %v1658
      %v1795 = vunpack.c.h.b16 %v1658
      %v1796 = vunpack.c.l.b16 %v1659
      %v1797 = vunpack.c.h.b16 %v1659
      %v1798 = vunpack.c.l.b16 %v1660
      %v1799 = vunpack.c.h.b16 %v1660
      %v1800 = vunpack.c.l.b16 %v1661
      %v1801 = vunpack.c.h.b16 %v1661
      %v1802 = vunpack.c.l.b16 %v1662
      %v1803 = vunpack.c.h.b16 %v1662
      %v1804 = vunpack.c.l.b16 %v1663
      %v1805 = vunpack.c.h.b16 %v1663
      %v1806 = vunpack.c.l.b16 %v1664
      %v1807 = vunpack.c.h.b16 %v1664
      %v1808 = vunpack.c.l.b16 %v1665
      %v1809 = vunpack.c.h.b16 %v1665
      %v1810 = vunpack.c.l.b16 %v1666
      %v1811 = vunpack.c.h.b16 %v1666
      %v1812 = vunpack.c.l.b16 %v1667
      %v1813 = vunpack.c.h.b16 %v1667
      %v1814 = vunpack.c.l.b16 %v1668
      %v1815 = vunpack.c.h.b16 %v1668
      %v1816 = vunpack.c.l.b16 %v1669
      %v1817 = vunpack.c.h.b16 %v1669
      %v1818 = vunpack.c.l.b16 %v1670
      %v1819 = vunpack.c.h.b16 %v1670
      %v1820 = vunpack.c.l.b16 %v1671
      %v1821 = vunpack.c.h.b16 %v1671
      %v1822 = vunpack.c.l.b16 %v1672
      %v1823 = vunpack.c.h.b16 %v1672
      %v1824 = vunpack.c.l.b16 %v1673
      %v1825 = vunpack.c.h.b16 %v1673
      %v1826 = vunpack.c.l.b16 %v1674
      %v1827 = vunpack.c.h.b16 %v1674
      %v1828 = vunpack.c.l.b16 %v1675
      %v1829 = vunpack.c.h.b16 %v1675
      %v1830 = vunpack.c.l.b16 %v1676
      %v1831 = vunpack.c.h.b16 %v1676
      %v1832 = vunpack.c.l.b16 %v1677
      %v1833 = vunpack.c.h.b16 %v1677
      %v1834 = vunpack.c.l.b16 %v1678
      %v1835 = vunpack.c.h.b16 %v1678
      %v1836 = vunpack.c.l.b16 %v1679
      %v1837 = vunpack.c.h.b16 %v1679
      %v1838 = vunpack.c.l.b16 %v1680
      %v1839 = vunpack.c.h.b16 %v1680
      %v1840 = vunpack.c.l.b16 %v1681
      %v1841 = vunpack.c.h.b16 %v1681
      %v1842 = vunpack.c.l.b16 %v1682
      %v1843 = vunpack.c.h.b16 %v1682
      %v1844 = vunpack.c.l.b16 %v1683
      %v1845 = vunpack.c.h.b16 %v1683
      %v1846 = vunpack.c.l.b16 %v1684
      %v1847 = vunpack.c.h.b16 %v1684
      %v1848 = vunpack.c.l.b16 %v1685
      %v1849 = vunpack.c.h.b16 %v1685
      %v1850 = vunpack.c.l.b16 %v1686
      %v1851 = vunpack.c.h.b16 %v1686
      %v1852 = vunpack.c.l.b16 %v1687
      %v1853 = vunpack.c.h.b16 %v1687
      %v1854 = vunpack.c.l.b16 %v1688
      %v1855 = vunpack.c.h.b16 %v1688
      %v1856 = vunpack.c.l.b16 %v1689
      %v1857 = vunpack.c.h.b16 %v1689
      %v1858 = vpack.c.b16 %v1746, %v1746
      %v1859 = vpack.c.b16 %v1747, %v1747
      %v1860 = vpack.c.b16 %v1748, %v1748
      %v1861 = vpack.c.b16 %v1749, %v1749
      %v1862 = vpack.c.b16 %v1750, %v1750
      %v1863 = vpack.c.b16 %v1751, %v1751
      %v1864 = vpack.c.b16 %v1752, %v1752
      %v1865 = vpack.c.b16 %v1753, %v1753
      %v1866 = vpack.c.b16 %v1754, %v1754
      %v1867 = vpack.c.b16 %v1755, %v1755
      %v1868 = vpack.c.b16 %v1756, %v1756
      %v1869 = vpack.c.b16 %v1757, %v1757
      %v1870 = vpack.c.b16 %v1758, %v1758
      %v1871 = vpack.c.b16 %v1759, %v1759
      %v1872 = vpack.c.b16 %v1760, %v1760
      %v1873 = vpack.c.b16 %v1761, %v1761
      %v1874 = vpack.c.b16 %v1762, %v1762
      %v1875 = vpack.c.b16 %v1763, %v1763
      %v1876 = vpack.c.b16 %v1764, %v1764
      %v1877 = vpack.c.b16 %v1765, %v1765
      %v1878 = vpack.c.b16 %v1766, %v1766
      %v1879 = vpack.c.b16 %v1767, %v1767
      %v1880 = vpack.c.b16 %v1768, %v1768
      %v1881 = vpack.c.b16 %v1769, %v1769
      %v1882 = vpack.c.b16 %v1770, %v1770
      %v1883 = vpack.c.b16 %v1771, %v1771
      %v1884 = vpack.c.b16 %v1772, %v1772
      %v1885 = vpack.c.b16 %v1773, %v1773
      %v1886 = vpack.c.b16 %v1774, %v1774
      %v1887 = vpack.c.b16 %v1775, %v1775
      %v1888 = vpack.c.b16 %v1776, %v1776
      %v1889 = vpack.c.b16 %v1777, %v1777
      %v1890 = vpack.c.b16 %v1778, %v1778
      %v1891 = vpack.c.b16 %v1779, %v1779
      %v1892 = vpack.c.b16 %v1780, %v1780
      %v1893 = vpack.c.b16 %v1781, %v1781
      %v1894 = vpack.c.b16 %v1782, %v1782
      %v1895 = vpack.c.b16 %v1783, %v1783
      %v1896 = vpack.c.b16 %v1784, %v1784
      %v1897 = vpack.c.b16 %v1785, %v1785
      %v1898 = vpack.c.b16 %v1786, %v1786
      %v1899 = vpack.c.b16 %v1787, %v1787
      %v1900 = vpack.c.b16 %v1788, %v1788
      %v1901 = vpack.c.b16 %v1789, %v1789
      %v1902 = vpack.c.b16 %v1790, %v1790
      %v1903 = vpack.c.b16 %v1791, %v1791
      %v1904 = vpack.c.b16 %v1792, %v1792
      %v1905 = vpack.c.b16 %v1793, %v1793
      %v1906 = vpack.c.b16 %v1794, %v1794
      %v1907 = vpack.c.b16 %v1795, %v1795
      %v1908 = vpack.c.b16 %v1796, %v1796
      %v1909 = vpack.c.b16 %v1797, %v1797
      %v1910 = vpack.c.b16 %v1798, %v1798
      %v1911 = vpack.c.b16 %v1799, %v1799
      %v1912 = vpack.c.b16 %v1800, %v1800
      %v1913 = vpack.c.b16 %v1801, %v1801
      %v1914 = vpack.c.b16 %v1802, %v1802
      %v1915 = vpack.c.b16 %v1803, %v1803
      %v1916 = vpack.c.b16 %v1804, %v1804
      %v1917 = vpack.c.b16 %v1805, %v1805
      %v1918 = vpack.c.b16 %v1806, %v1806
      %v1919 = vpack.c.b16 %v1807, %v1807
      %v1920 = vpack.c.b16 %v1808, %v1808
      %v1921 = vpack.c.b16 %v1809, %v1809
      %v1922 = vpack.c.b16 %v1810, %v1810
      %v1923 = vpack.c.b16 %v1811, %v1811
      %v1924 = vpack.c.b16 %v1812, %v1812
      %v1925 = vpack.c.b16 %v1813, %v1813
      %v1926 = vpack.c.b16 %v1814, %v1814
      %v1927 = vpack.c.b16 %v1815, %v1815
      %v1928 = vpack.c.b16 %v1816, %v1816
      %v1929 = vpack.c.b16 %v1817, %v1817
      %v1930 = vpack.c.b16 %v1818, %v1818
      %v1931 = vpack.c.b16 %v1819, %v1819
      %v1932 = vpack.c.b16 %v1820, %v1820
      %v1933 = vpack.c.b16 %v1821, %v1821
      %v1934 = vpack.c.b16 %v1822, %v1822
      %v1935 = vpack.c.b16 %v1823, %v1823
      %v1936 = vpack.c.b16 %v1824, %v1824
      %v1937 = vpack.c.b16 %v1825, %v1825
      %v1938 = vpack.c.b16 %v1826, %v1826
      %v1939 = vpack.c.b16 %v1827, %v1827
      %v1940 = vpack.c.b16 %v1828, %v1828
      %v1941 = vpack.c.b16 %v1829, %v1829
      %v1942 = vpack.c.b16 %v1830, %v1830
      %v1943 = vpack.c.b16 %v1831, %v1831
      %v1944 = vpack.c.b16 %v1832, %v1832
      %v1945 = vpack.c.b16 %v1833, %v1833
      %v1946 = vpack.c.b16 %v1834, %v1834
      %v1947 = vpack.c.b16 %v1835, %v1835
      %v1948 = vpack.c.b16 %v1836, %v1836
      %v1949 = vpack.c.b16 %v1837, %v1837
      %v1950 = vpack.c.b16 %v1838, %v1838
      %v1951 = vpack.c.b16 %v1839, %v1839
      %v1952 = vpack.c.b16 %v1840, %v1840
      %v1953 = vpack.c.b16 %v1841, %v1841
      %v1954 = vpack.c.b16 %v1842, %v1842
      %v1955 = vpack.c.b16 %v1843, %v1843
      %v1956 = vpack.c.b16 %v1844, %v1844
      %v1957 = vpack.c.b16 %v1845, %v1845
      %v1958 = vpack.c.b16 %v1846, %v1846
      %v1959 = vpack.c.b16 %v1847, %v1847
      %v1960 = vpack.c.b16 %v1848, %v1848
      %v1961 = vpack.c.b16 %v1849, %v1849
      %v1962 = vpack.c.b16 %v1850, %v1850
      %v1963 = vpack.c.b16 %v1851, %v1851
      %v1964 = vpack.c.b16 %v1852, %v1852
      %v1965 = vpack.c.b16 %v1853, %v1853
      %v1966 = vpack.c.b16 %v1854, %v1854
      %v1967 = vpack.c.b16 %v1855, %v1855
      %v1968 = vpack.c.b16 %v1856, %v1856
      %v1969 = vpack.c.b16 %v1857, %v1857
      %vm2082 = vcmask 27648
      %2083 = vst.msk [vmem:[%s199] sm:$0xf] %vm2082, %v1858
      %2084 = vst.msk [vmem:[%s199 + $0x4] sm:$0xf] %vm2082, %v1859
      %2085 = vst.msk [vmem:[%s199 + $0x8] sm:$0xf] %vm2082, %v1860
      %2086 = vst.msk [vmem:[%s199 + $0xc] sm:$0xf] %vm2082, %v1861
      %2087 = vst.msk [vmem:[%s199 + $0x10] sm:$0xf] %vm2082, %v1862
      %2088 = vst.msk [vmem:[%s199 + $0x14] sm:$0xf] %vm2082, %v1863
      %2089 = vst.msk [vmem:[%s199 + $0x18] sm:$0xf] %vm2082, %v1864
      %2090 = vst.msk [vmem:[%s199 + $0x1c] sm:$0xf] %vm2082, %v1865
      %2091 = vst.msk [vmem:[%s199 + $0x20] sm:$0xf] %vm2082, %v1866
      %2092 = vst.msk [vmem:[%s199 + $0x24] sm:$0xf] %vm2082, %v1867
      %2093 = vst.msk [vmem:[%s199 + $0x28] sm:$0xf] %vm2082, %v1868
      %2094 = vst.msk [vmem:[%s199 + $0x2c] sm:$0xf] %vm2082, %v1869
      %2095 = vst.msk [vmem:[%s199 + $0x30] sm:$0xf] %vm2082, %v1870
      %2096 = vst.msk [vmem:[%s199 + $0x34] sm:$0xf] %vm2082, %v1871
      %2097 = vst.msk [vmem:[%s199 + $0x38] sm:$0xf] %vm2082, %v1872
      %2098 = vst.msk [vmem:[%s199 + $0x3c] sm:$0xf] %vm2082, %v1873
      %2099 = vst.msk [vmem:[%s199 + $0x40] sm:$0xf] %vm2082, %v1874
      %2100 = vst.msk [vmem:[%s199 + $0x44] sm:$0xf] %vm2082, %v1875
      %2101 = vst.msk [vmem:[%s199 + $0x48] sm:$0xf] %vm2082, %v1876
      %2102 = vst.msk [vmem:[%s199 + $0x4c] sm:$0xf] %vm2082, %v1877
      %2103 = vst.msk [vmem:[%s199 + $0x50] sm:$0xf] %vm2082, %v1878
      %2104 = vst.msk [vmem:[%s199 + $0x54] sm:$0xf] %vm2082, %v1879
      %2105 = vst.msk [vmem:[%s199 + $0x58] sm:$0xf] %vm2082, %v1880
      %2106 = vst.msk [vmem:[%s199 + $0x5c] sm:$0xf] %vm2082, %v1881
      %2107 = vst.msk [vmem:[%s199 + $0x60] sm:$0xf] %vm2082, %v1882
      %2108 = vst.msk [vmem:[%s199 + $0x64] sm:$0xf] %vm2082, %v1883
      %2109 = vst.msk [vmem:[%s199 + $0x68] sm:$0xf] %vm2082, %v1884
      %2110 = vst.msk [vmem:[%s199 + $0x6c] sm:$0xf] %vm2082, %v1885
      %2111 = vst.msk [vmem:[%s199 + $0x70] sm:$0xf] %vm2082, %v1886
      %2112 = vst.msk [vmem:[%s199 + $0x74] sm:$0xf] %vm2082, %v1887
      %2113 = vst.msk [vmem:[%s199 + $0x78] sm:$0xf] %vm2082, %v1888
      %2114 = vst.msk [vmem:[%s199 + $0x7c] sm:$0xf] %vm2082, %v1889
      %2115 = vst.msk [vmem:[%s199 + $0x80] sm:$0xf] %vm2082, %v1890
      %2116 = vst.msk [vmem:[%s199 + $0x84] sm:$0xf] %vm2082, %v1891
      %2117 = vst.msk [vmem:[%s199 + $0x88] sm:$0xf] %vm2082, %v1892
      %2118 = vst.msk [vmem:[%s199 + $0x8c] sm:$0xf] %vm2082, %v1893
      %2119 = vst.msk [vmem:[%s199 + $0x90] sm:$0xf] %vm2082, %v1894
      %2120 = vst.msk [vmem:[%s199 + $0x94] sm:$0xf] %vm2082, %v1895
      %2121 = vst.msk [vmem:[%s199 + $0x98] sm:$0xf] %vm2082, %v1896
      %2122 = vst.msk [vmem:[%s199 + $0x9c] sm:$0xf] %vm2082, %v1897
      %2123 = vst.msk [vmem:[%s199 + $0xa0] sm:$0xf] %vm2082, %v1898
      %2124 = vst.msk [vmem:[%s199 + $0xa4] sm:$0xf] %vm2082, %v1899
      %2125 = vst.msk [vmem:[%s199 + $0xa8] sm:$0xf] %vm2082, %v1900
      %2126 = vst.msk [vmem:[%s199 + $0xac] sm:$0xf] %vm2082, %v1901
      %2127 = vst.msk [vmem:[%s199 + $0xb0] sm:$0xf] %vm2082, %v1902
      %2128 = vst.msk [vmem:[%s199 + $0xb4] sm:$0xf] %vm2082, %v1903
      %2129 = vst.msk [vmem:[%s199 + $0xb8] sm:$0xf] %vm2082, %v1904
      %2130 = vst.msk [vmem:[%s199 + $0xbc] sm:$0xf] %vm2082, %v1905
      %2131 = vst.msk [vmem:[%s199 + $0xc0] sm:$0xf] %vm2082, %v1906
      %2132 = vst.msk [vmem:[%s199 + $0xc4] sm:$0xf] %vm2082, %v1907
      %2133 = vst.msk [vmem:[%s199 + $0xc8] sm:$0xf] %vm2082, %v1908
      %2134 = vst.msk [vmem:[%s199 + $0xcc] sm:$0xf] %vm2082, %v1909
      %2135 = vst.msk [vmem:[%s199 + $0xd0] sm:$0xf] %vm2082, %v1910
      %2136 = vst.msk [vmem:[%s199 + $0xd4] sm:$0xf] %vm2082, %v1911
      %2137 = vst.msk [vmem:[%s199 + $0xd8] sm:$0xf] %vm2082, %v1912
      %2138 = vst.msk [vmem:[%s199 + $0xdc] sm:$0xf] %vm2082, %v1913
      %2139 = vst.msk [vmem:[%s199 + $0xe0] sm:$0xf] %vm2082, %v1914
      %2140 = vst.msk [vmem:[%s199 + $0xe4] sm:$0xf] %vm2082, %v1915
      %2141 = vst.msk [vmem:[%s199 + $0xe8] sm:$0xf] %vm2082, %v1916
      %2142 = vst.msk [vmem:[%s199 + $0xec] sm:$0xf] %vm2082, %v1917
      %2143 = vst.msk [vmem:[%s199 + $0xf0] sm:$0xf] %vm2082, %v1918
      %2144 = vst.msk [vmem:[%s199 + $0xf4] sm:$0xf] %vm2082, %v1919
      %2145 = vst.msk [vmem:[%s199 + $0xf8] sm:$0xf] %vm2082, %v1920
      %2146 = vst.msk [vmem:[%s199 + $0xfc] sm:$0xf] %vm2082, %v1921
      %2147 = vst.msk [vmem:[%s199 + $0x100] sm:$0xf] %vm2082, %v1922
      %2148 = vst.msk [vmem:[%s199 + $0x104] sm:$0xf] %vm2082, %v1923
      %2149 = vst.msk [vmem:[%s199 + $0x108] sm:$0xf] %vm2082, %v1924
      %2150 = vst.msk [vmem:[%s199 + $0x10c] sm:$0xf] %vm2082, %v1925
      %2151 = vst.msk [vmem:[%s199 + $0x110] sm:$0xf] %vm2082, %v1926
      %2152 = vst.msk [vmem:[%s199 + $0x114] sm:$0xf] %vm2082, %v1927
      %2153 = vst.msk [vmem:[%s199 + $0x118] sm:$0xf] %vm2082, %v1928
      %2154 = vst.msk [vmem:[%s199 + $0x11c] sm:$0xf] %vm2082, %v1929
      %2155 = vst.msk [vmem:[%s199 + $0x120] sm:$0xf] %vm2082, %v1930
      %2156 = vst.msk [vmem:[%s199 + $0x124] sm:$0xf] %vm2082, %v1931
      %2157 = vst.msk [vmem:[%s199 + $0x128] sm:$0xf] %vm2082, %v1932
      %2158 = vst.msk [vmem:[%s199 + $0x12c] sm:$0xf] %vm2082, %v1933
      %2159 = vst.msk [vmem:[%s199 + $0x130] sm:$0xf] %vm2082, %v1934
      %2160 = vst.msk [vmem:[%s199 + $0x134] sm:$0xf] %vm2082, %v1935
      %2161 = vst.msk [vmem:[%s199 + $0x138] sm:$0xf] %vm2082, %v1936
      %2162 = vst.msk [vmem:[%s199 + $0x13c] sm:$0xf] %vm2082, %v1937
      %2163 = vst.msk [vmem:[%s199 + $0x140] sm:$0xf] %vm2082, %v1938
      %2164 = vst.msk [vmem:[%s199 + $0x144] sm:$0xf] %vm2082, %v1939
      %2165 = vst.msk [vmem:[%s199 + $0x148] sm:$0xf] %vm2082, %v1940
      %2166 = vst.msk [vmem:[%s199 + $0x14c] sm:$0xf] %vm2082, %v1941
      %2167 = vst.msk [vmem:[%s199 + $0x150] sm:$0xf] %vm2082, %v1942
      %2168 = vst.msk [vmem:[%s199 + $0x154] sm:$0xf] %vm2082, %v1943
      %2169 = vst.msk [vmem:[%s199 + $0x158] sm:$0xf] %vm2082, %v1944
      %2170 = vst.msk [vmem:[%s199 + $0x15c] sm:$0xf] %vm2082, %v1945
      %2171 = vst.msk [vmem:[%s199 + $0x160] sm:$0xf] %vm2082, %v1946
      %2172 = vst.msk [vmem:[%s199 + $0x164] sm:$0xf] %vm2082, %v1947
      %2173 = vst.msk [vmem:[%s199 + $0x168] sm:$0xf] %vm2082, %v1948
      %2174 = vst.msk [vmem:[%s199 + $0x16c] sm:$0xf] %vm2082, %v1949
      %2175 = vst.msk [vmem:[%s199 + $0x170] sm:$0xf] %vm2082, %v1950
      %2176 = vst.msk [vmem:[%s199 + $0x174] sm:$0xf] %vm2082, %v1951
      %2177 = vst.msk [vmem:[%s199 + $0x178] sm:$0xf] %vm2082, %v1952
      %2178 = vst.msk [vmem:[%s199 + $0x17c] sm:$0xf] %vm2082, %v1953
      %2179 = vst.msk [vmem:[%s199 + $0x180] sm:$0xf] %vm2082, %v1954
      %2180 = vst.msk [vmem:[%s199 + $0x184] sm:$0xf] %vm2082, %v1955
      %2181 = vst.msk [vmem:[%s199 + $0x188] sm:$0xf] %vm2082, %v1956
      %2182 = vst.msk [vmem:[%s199 + $0x18c] sm:$0xf] %vm2082, %v1957
      %2183 = vst.msk [vmem:[%s199 + $0x190] sm:$0xf] %vm2082, %v1958
      %2184 = vst.msk [vmem:[%s199 + $0x194] sm:$0xf] %vm2082, %v1959
      %2185 = vst.msk [vmem:[%s199 + $0x198] sm:$0xf] %vm2082, %v1960
      %2186 = vst.msk [vmem:[%s199 + $0x19c] sm:$0xf] %vm2082, %v1961
      %2187 = vst.msk [vmem:[%s199 + $0x1a0] sm:$0xf] %vm2082, %v1962
      %2188 = vst.msk [vmem:[%s199 + $0x1a4] sm:$0xf] %vm2082, %v1963
      %2189 = vst.msk [vmem:[%s199 + $0x1a8] sm:$0xf] %vm2082, %v1964
      %2190 = vst.msk [vmem:[%s199 + $0x1ac] sm:$0xf] %vm2082, %v1965
      %2191 = vst.msk [vmem:[%s199 + $0x1b0] sm:$0xf] %vm2082, %v1966
      %2192 = vst.msk [vmem:[%s199 + $0x1b4] sm:$0xf] %vm2082, %v1967
      %2193 = vst.msk [vmem:[%s199 + $0x1b8] sm:$0xf] %vm2082, %v1968
      %2194 = vst.msk [vmem:[%s199 + $0x1bc] sm:$0xf] %vm2082, %v1969
      %s2195 = smul.u32 112, %s15
      %p2196 = scmp.lt.s32.totalorder %s2195, 3135
      %s2197 = scalar_select %p2196, %s2195, 3135
      %s2198 = smul.addr %s2197, 4
      %s2199 = scalar_lea.vmem %s4, %s2198
      // Predicated region
      $region37: #{tpu_custom_call.1} parent=35 // pred_check
        %p2200 = pneg %p122
      $region38: #{tpu_custom_call.1} parent=35 // pred_check_branch
        %2202 = sbr.rel (%p2200) target = $region40
      $region39: #{tpu_custom_call.1} parent=35 // pred_region
        %s2203 = smul.u32 112, %s15
      $region40: #{tpu_custom_call.1} parent=35 // pred_fallthru
        _
    $region36: #{tpu_custom_call.1} parent=5 // pred_fallthru
      _
    %p2204 = scmp.le.s32.totalorder 2, %s10
    // Predicated region
    $region41: #{tpu_custom_call.1} parent=5 // pred_check
      %p2205 = pneg %p2204
    $region42: #{tpu_custom_call.1} parent=5 // pred_check_branch
      %2207 = sbr.rel (%p2205) target = $region44
    $region43: #{tpu_custom_call.1} parent=5 // pred_region
      %s2208 = ssub.s32 %s10, 2
      // Predicated region
      $region45: #{tpu_custom_call.1} parent=43 // pred_check
        %p2209 = pneg %p128
      $region46: #{tpu_custom_call.1} parent=43 // pred_check_branch
        %2211 = sbr.rel (%p2209) target = $region48
      $region47: #{tpu_custom_call.1} parent=43 // pred_region
        %s2212 = smul.u32 112, %s16
        %p2213 = scmp.lt.s32.totalorder %s2212, 3135
        %s2214 = scalar_select %p2213, %s2212, 3135
        %s2215 = smul.addr %s2214, 4
        %s2216 = scalar_lea.vmem %s4, %s2215
      $region48: #{tpu_custom_call.1} parent=43 // pred_fallthru
        _
    $region44: #{tpu_custom_call.1} parent=5 // pred_fallthru
      _
  $region6: #{tpu_custom_call.1} parent=0 // loop_footer
    %s14 = sadd.s32 1, %s10
  $region7: #{tpu_custom_call.1} parent=0 // loop_footer_branch
    %9 = sbr.rel target = $region3
  $region8: #{tpu_custom_call.1} parent=0 // loop_exit
    _

</llo_original>
